<compile_context>
chip_gen: v7x
topology: tpu7x:2x2x1
jax: 0.10.0
libtpu: 0.0.40
codegen_flags: <defaults>
</compile_context>

<pallas_src>
import math

import numpy as np

import jax
import jax.numpy as jnp
from jax.experimental import pallas as pl
from jax.experimental.pallas import tpu as pltpu


# ----------------------------------------------------------------------------
# Host-side (NumPy) Legendre multiwavelet filter construction
# (replicates get_phi_psi / get_filter for base='legendre' without sympy/scipy)
# ----------------------------------------------------------------------------
def _shifted_legendre_coeffs(ki, scale, shift):
    """Ascending power-series coeffs of P_ki(scale*x + shift)."""
    c_leg = np.zeros(ki + 1)
    c_leg[-1] = 1.0
    c_pow = np.polynomial.legendre.leg2poly(c_leg)  # ascending coeffs in t
    res = np.zeros(ki + 1)
    lin = np.array([shift, scale], dtype=np.float64)  # shift + scale*x
    cur = np.array([1.0])
    for j in range(ki + 1):
        term = c_pow[j] * cur
        res[: len(term)] += term
        cur = np.convolve(cur, lin)
    return res


def _get_phi_psi_legendre(k):
    phi_coeff = np.zeros((k, k))
    phi_2x_coeff = np.zeros((k, k))
    for ki in range(k):
        phi_coeff[ki, : ki + 1] = np.sqrt(2 * ki + 1) * _shifted_legendre_coeffs(ki, 2.0, -1.0)
        phi_2x_coeff[ki, : ki + 1] = (
            np.sqrt(2) * np.sqrt(2 * ki + 1) * _shifted_legendre_coeffs(ki, 4.0, -1.0)
        )

    def _int_0_half(prod):
        n = np.arange(len(prod))
        return (prod * (1.0 / (n + 1)) * np.power(0.5, 1 + n)).sum()

    def _int_half_1(prod):
        n = np.arange(len(prod))
        return (prod * (1.0 / (n + 1)) * (1 - np.power(0.5, 1 + n))).sum()

    psi1_coeff = np.zeros((k, k))
    psi2_coeff = np.zeros((k, k))
    for ki in range(k):
        psi1_coeff[ki, :] = phi_2x_coeff[ki, :]
        for i in range(k):
            prod_ = np.convolve(phi_2x_coeff[ki, : ki + 1], phi_coeff[i, : i + 1])
            prod_[np.abs(prod_) < 1e-8] = 0
            proj_ = _int_0_half(prod_)
            psi1_coeff[ki, :] -= proj_ * phi_coeff[i, :]
            psi2_coeff[ki, :] -= proj_ * phi_coeff[i, :]
        for j in range(ki):
            prod_ = np.convolve(phi_2x_coeff[ki, : ki + 1], psi1_coeff[j, :])
            prod_[np.abs(prod_) < 1e-8] = 0
            proj_ = _int_0_half(prod_)
            psi1_coeff[ki, :] -= proj_ * psi1_coeff[j, :]
            psi2_coeff[ki, :] -= proj_ * psi2_coeff[j, :]
        prod_ = np.convolve(psi1_coeff[ki, :], psi1_coeff[ki, :])
        prod_[np.abs(prod_) < 1e-8] = 0
        norm1 = _int_0_half(prod_)
        prod_ = np.convolve(psi2_coeff[ki, :], psi2_coeff[ki, :])
        prod_[np.abs(prod_) < 1e-8] = 0
        norm2 = _int_half_1(prod_)
        norm_ = np.sqrt(norm1 + norm2)
        psi1_coeff[ki, :] /= norm_
        psi2_coeff[ki, :] /= norm_
        psi1_coeff[np.abs(psi1_coeff) < 1e-8] = 0
        psi2_coeff[np.abs(psi2_coeff) < 1e-8] = 0

    phi = [np.poly1d(np.flip(phi_coeff[i, :])) for i in range(k)]
    psi1 = [np.poly1d(np.flip(psi1_coeff[i, :])) for i in range(k)]
    psi2 = [np.poly1d(np.flip(psi2_coeff[i, :])) for i in range(k)]
    return phi, psi1, psi2


def _get_filter_legendre(k):
    phi, psi1, psi2 = _get_phi_psi_legendre(k)
    H0 = np.zeros((k, k)); H1 = np.zeros((k, k))
    G0 = np.zeros((k, k)); G1 = np.zeros((k, k))

    # roots of P_k(2x-1) and the corresponding quadrature weights
    e_k = np.zeros(k + 1); e_k[-1] = 1.0
    x_m = (np.polynomial.legendre.legroots(e_k) + 1.0) / 2.0

    def _legendre_der(kk, x):
        out = np.zeros_like(x)
        for i in np.arange(kk - 1, -1, -2):
            ci = np.zeros(i + 1); ci[-1] = 1.0
            out = out + (2 * i + 1) * np.polynomial.legendre.legval(x, ci)
        return out

    e_km1 = np.zeros(k); e_km1[-1] = 1.0
    wm = 1.0 / k / _legendre_der(k, 2 * x_m - 1) / np.polynomial.legendre.legval(2 * x_m - 1, e_km1)

    def _psi(i, inp):
        mask = (inp <= 0.5) * 1.0
        return psi1[i](inp) * mask + psi2[i](inp) * (1 - mask)

    for ki in range(k):
        for kpi in range(k):
            H0[ki, kpi] = 1 / np.sqrt(2) * (wm * phi[ki](x_m / 2) * phi[kpi](x_m)).sum()
            G0[ki, kpi] = 1 / np.sqrt(2) * (wm * _psi(ki, x_m / 2) * phi[kpi](x_m)).sum()
            H1[ki, kpi] = 1 / np.sqrt(2) * (wm * phi[ki]((x_m + 1) / 2) * phi[kpi](x_m)).sum()
            G1[ki, kpi] = 1 / np.sqrt(2) * (wm * _psi(ki, (x_m + 1) / 2) * phi[kpi](x_m)).sum()
    PHI0 = np.eye(k); PHI1 = np.eye(k)
    for M in (H0, H1, G0, G1):
        M[np.abs(M) < 1e-8] = 0
    return H0, H1, G0, G1, PHI0, PHI1


# ----------------------------------------------------------------------------
# Pallas kernels
# ----------------------------------------------------------------------------
def _round_up(n, m):
    return ((n + m - 1) // m) * m


def _linear_bias_kernel(x_ref, w_ref, b_ref, o_ref):
    acc = jnp.dot(x_ref[...], w_ref[...], preferred_element_type=jnp.float32)
    o_ref[...] = acc + b_ref[...]


def pallas_linear(x2d, w, b=None, row_tile=256):
    """(R, M) @ (M, K) + b, row-tiled & pipelined over a 1-D grid."""
    R, M = x2d.shape
    Mw, K = w.shape
    assert M == Mw
    x2d = x2d.astype(jnp.float32)
    w = w.astype(jnp.float32)
    b2 = jnp.zeros((1, K), jnp.float32) if b is None else b.reshape(1, K).astype(jnp.float32)

    # Tile the streamed (row) axis; keep tiles small enough that
    # 2 pipeline buffers comfortably fit even v7x's 32 MiB scoped VMEM budget.
    rt = min(row_tile, _round_up(R, 8))
    R_pad = _round_up(R, rt)
    if R_pad != R:
        x2d = jnp.pad(x2d, ((0, R_pad - R), (0, 0)))

    out = pl.pallas_call(
        _linear_bias_kernel,
        out_shape=jax.ShapeDtypeStruct((R_pad, K), jnp.float32),
        grid_spec=pltpu.PrefetchScalarGridSpec(
            num_scalar_prefetch=0,
            grid=(R_pad // rt,),
            in_specs=[
                pl.BlockSpec((rt, M), lambda i: (i, 0)),
                pl.BlockSpec((Mw, K), lambda i: (0, 0)),
                pl.BlockSpec((1, K), lambda i: (0, 0)),
            ],
            out_specs=pl.BlockSpec((rt, K), lambda i: (i, 0)),
        ),
        compiler_params=pltpu.CompilerParams(dimension_semantics=("parallel",)),
        cost_estimate=pl.CostEstimate(
            flops=2 * R_pad * M * K,
            transcendentals=0,
            bytes_accessed=4 * (R_pad * M + M * K + K + R_pad * K),
        ),
    )(x2d, w, b2)
    return out[:R]


def _complex_mix_kernel(x_ref, w_ref, o_ref):
    # One real MXU matmul per Fourier mode (real-stacked complex contraction).
    o_ref[0] = jnp.dot(x_ref[0], w_ref[0], preferred_element_type=jnp.float32)


def pallas_complex_mix(x, w):
    """Per-mode contraction: out[m] = x[m] @ w[m]; grid over modes, "parallel"."""
    l, B, I = x.shape
    _, _, O = w.shape
    return pl.pallas_call(
        _complex_mix_kernel,
        out_shape=jax.ShapeDtypeStruct((l, B, O), jnp.float32),
        grid_spec=pltpu.PrefetchScalarGridSpec(
            num_scalar_prefetch=0,
            grid=(l,),
            in_specs=[
                pl.BlockSpec((1, B, I), lambda m: (m, 0, 0)),
                pl.BlockSpec((1, I, O), lambda m: (m, 0, 0)),
            ],
            out_specs=pl.BlockSpec((1, B, O), lambda m: (m, 0, 0)),
        ),
        compiler_params=pltpu.CompilerParams(dimension_semantics=("parallel",)),
        cost_estimate=pl.CostEstimate(
            flops=2 * l * B * I * O,
            transcendentals=0,
            bytes_accessed=4 * (l * B * I + l * I * O + l * B * O),
        ),
    )(x.astype(jnp.float32), w.astype(jnp.float32))


# ----------------------------------------------------------------------------
# Model forward (use_pallas=False gives the pure-jnp reference path)
# ----------------------------------------------------------------------------
def _linear(x2d, w, b, use_pallas):
    if use_pallas:
        return pallas_linear(x2d, w, b)
    y = jnp.dot(x2d, w, precision=jax.lax.Precision.HIGHEST)
    if b is not None:
        y = y + b
    return y


def _sparse_kernel_ft1d_ref(x, wr, wi, modes):
    """sparseKernelFT1d.forward — pure jnp reference (unfused, HIGHEST precision)."""
    B, N, c, k = x.shape
    ck = c * k
    xf = jnp.transpose(x.reshape(B, N, ck), (0, 2, 1))  # (B, ck, N)
    if N == 1:
        x_fft = xf.astype(jnp.complex64)                # rfft of length-1 signal
    else:
        x_fft = jnp.fft.rfft(xf, axis=-1)               # (B, ck, N//2+1)
    nf = N // 2 + 1
    l = min(modes, nf)
    w_c = (wr[:, :, :l] + 1j * wi[:, :, :l]).astype(jnp.complex64)
    out_low = jnp.einsum('bix,iox->box', x_fft[:, :, :l], w_c,
                         precision=jax.lax.Precision.HIGHEST)
    out_ft = jnp.zeros((B, ck, nf), jnp.complex64).at[:, :, :l].set(out_low)
    if N == 1:
        xo = jnp.real(out_ft)
    else:
        xo = jnp.fft.irfft(out_ft, n=N, axis=-1)
    return jnp.transpose(xo, (0, 2, 1)).reshape(B, N, c, k).astype(jnp.float32)


def _dual_sparse_ft_pallas(d, s, cz):
    """Fused Ud = A(d) + B(s), Us = C(d).

    The three sparseKernelFT1d applications share FFTs; the per-mode complex
    contraction is done as ONE real MXU matmul per mode with the block weight
        W = [[A, C], [B, 0]]   (complex),
    real-stacked to [[Wr, Wi], [-Wi, Wr]].  Adding A(d) and B(s) in the
    frequency domain before the inverse FFT is exact by linearity.
    """
    B, N, c, k = d.shape
    ck = c * k
    df = jnp.transpose(d.reshape(B, N, ck), (0, 2, 1))   # (B, ck, N)
    sf = jnp.transpose(s.reshape(B, N, ck), (0, 2, 1))
    if N == 1:
        d_fft = df.astype(jnp.complex64)
        s_fft = sf.astype(jnp.complex64)
    else:
        d_fft = jnp.fft.rfft(df, axis=-1)
        s_fft = jnp.fft.rfft(sf, axis=-1)
    nf = N // 2 + 1
    l = min(cz['modes'], nf)

    # complex input stacked along the contraction dim: (B, 2ck, l) -> (l, B, 2ck)
    x_low = jnp.concatenate([d_fft[:, :, :l], s_fft[:, :, :l]], axis=1)
    xr = jnp.transpose(jnp.real(x_low), (2, 0, 1)).astype(jnp.float32)
    xi = jnp.transpose(jnp.imag(x_low), (2, 0, 1)).astype(jnp.float32)

    def cat_w(wa, wc, wb):
        z = jnp.zeros_like(wc[:, :, :l])
        top = jnp.concatenate([wa[:, :, :l], wc[:, :, :l]], axis=1)   # (ck, 2ck, l)
        bot = jnp.concatenate([wb[:, :, :l], z], axis=1)              # (ck, 2ck, l)
        return jnp.transpose(jnp.concatenate([top, bot], axis=0), (2, 0, 1))  # (l, 2ck, 2ck)

    wr = cat_w(cz['A_wr'], cz['C_wr'], cz['B_wr']).astype(jnp.float32)
    wi = cat_w(cz['A_wi'], cz['C_wi'], cz['B_wi']).astype(jnp.float32)

    # real-stacked complex matmul: [xr|xi] @ [[wr, wi], [-wi, wr]]
    x_stk = jnp.concatenate([xr, xi], axis=-1)                                # (l, B, 4ck)
    w_stk = jnp.concatenate(
        [jnp.concatenate([wr, wi], axis=-1),
         jnp.concatenate([-wi, wr], axis=-1)], axis=1)                        # (l, 4ck, 4ck)

    out = pallas_complex_mix(x_stk, w_stk)                                    # (l, B, 4ck)
    O = 2 * ck
    out_c = (out[..., :O] + 1j * out[..., O:]).astype(jnp.complex64)          # (l, B, 2ck)
    out_c = jnp.transpose(out_c, (1, 2, 0))                                   # (B, 2ck, l)

    def back(freq_low):
        ft = jnp.zeros((B, ck, nf), jnp.complex64).at[:, :, :l].set(freq_low)
        xo = jnp.real(ft) if N == 1 else jnp.fft.irfft(ft, n=N, axis=-1)
        return jnp.transpose(xo, (0, 2, 1)).reshape(B, N, c, k).astype(jnp.float32)

    return back(out_c[:, :ck]), back(out_c[:, ck:])


def _wavelet_transform(x, ec_d, ec_s, use_pallas):
    B, N, c, k = x.shape
    xa = jnp.concatenate([x[:, ::2], x[:, 1::2]], axis=-1)      # (B, N//2, c, 2k)
    w = jnp.concatenate([ec_d, ec_s], axis=1)                   # (2k, 2k) fused weight
    out = _linear(xa.reshape(-1, 2 * k), w, None, use_pallas).reshape(B, N // 2, c, 2 * k)
    return out[..., :k], out[..., k:]                           # d, s


def _even_odd(x, rc_e, rc_o, k, use_pallas):
    B, N, c, two_k = x.shape
    assert two_k == 2 * k
    w = jnp.concatenate([rc_e, rc_o], axis=1)                   # (2k, 2k) fused weight
    out = _linear(x.reshape(-1, 2 * k), w, None, use_pallas).reshape(B, N, c, 2 * k)
    x_e = out[..., :k]
    x_o = out[..., k:]
    return jnp.stack([x_e, x_o], axis=2).reshape(B, 2 * N, c, k)  # interleave even/odd


def _mwt_cz1d_forward(x, cz, use_pallas):
    B, N, c, k = x.shape
    L = cz['L']
    ns = math.floor(math.log2(N))
    nl = 2 ** math.ceil(math.log2(N))
    if nl > N:
        x = jnp.concatenate([x, x[:, : nl - N]], axis=1)
    Ud, Us = [], []
    for _ in range(ns - L):
        d, x = _wavelet_transform(x, cz['ec_d'], cz['ec_s'], use_pallas)
        if use_pallas:
            ud, us = _dual_sparse_ft_pallas(d, x, cz)
        else:
            ud = (_sparse_kernel_ft1d_ref(d, cz['A_wr'], cz['A_wi'], cz['modes'])
                  + _sparse_kernel_ft1d_ref(x, cz['B_wr'], cz['B_wi'], cz['modes']))
            us = _sparse_kernel_ft1d_ref(d, cz['C_wr'], cz['C_wi'], cz['modes'])
        Ud.append(ud)
        Us.append(us)
    Bx, Nx, cx, kx = x.shape
    x = _linear(x.reshape(-1, kx), cz['T0_w'], cz['T0_b'], use_pallas).reshape(Bx, Nx, cx, kx)
    for i in range(ns - 1 - L, -1, -1):
        x = x + Us[i]
        x = jnp.concatenate([x, Ud[i]], axis=-1)
        x = _even_odd(x, cz['rc_e'], cz['rc_o'], k, use_pallas)
    return x[:, :N]


def multi_wavelet_transform_forward(queries, keys, values, attn_mask, params, use_pallas=True):
    del attn_mask
    B, L, H, E = queries.shape
    _, S, _, D = values.shape
    if L > S:
        zeros = jnp.zeros_like(queries[:, : L - S, :])
        values = jnp.concatenate([values, zeros], axis=1)
        keys = jnp.concatenate([keys, zeros], axis=1)
    else:
        values = values[:, :L]
        keys = keys[:, :L]
    c, k, nCZ = params['c'], params['k'], params['nCZ']

    values = values.reshape(B, L, -1)
    V = _linear(values.reshape(B * L, -1), params['Lk0_w'], params['Lk0_b'], use_pallas)
    V = V.reshape(B, L, c, k)
    for i in range(nCZ):
        V = _mwt_cz1d_forward(V, params['czs'][i], use_pallas)
        if i < nCZ - 1:
            V = jax.nn.relu(V)
    V = _linear(V.reshape(B * L, c * k), params['Lk1_w'], params['Lk1_b'], use_pallas)
    V = V.reshape(B, L, -1, D)
    return V, None


# ----------------------------------------------------------------------------
# Parameter initialization (deterministic)
# ----------------------------------------------------------------------------
def init_mwt_params(key, ich, k, alpha, c, nCZ, L):
    H0, H1, G0, G1, PHI0, PHI1 = _get_filter_legendre(k)
    H0r = H0 @ PHI0; G0r = G0 @ PHI0; H1r = H1 @ PHI1; G1r = G1 @ PHI1
    for M in (H0r, H1r, G0r, G1r):
        M[np.abs(M) < 1e-8] = 0.0
    ec_s = jnp.asarray(np.concatenate((H0.T, H1.T), axis=0), dtype=jnp.float32)
    ec_d = jnp.asarray(np.concatenate((G0.T, G1.T), axis=0), dtype=jnp.float32)
    rc_e = jnp.asarray(np.concatenate((H0r, G0r), axis=0), dtype=jnp.float32)
    rc_o = jnp.asarray(np.concatenate((H1r, G1r), axis=0), dtype=jnp.float32)

    ck = c * k
    scale = 1.0 / (ck * ck)

    def linear_init(kk, fan_in, fan_out):
        k1, k2 = jax.random.split(kk)
        bound = 1.0 / math.sqrt(fan_in)
        w = jax.random.uniform(k1, (fan_in, fan_out), jnp.float32, -bound, bound)
        b = jax.random.uniform(k2, (fan_out,), jnp.float32, -bound, bound)
        return w, b

    keys = jax.random.split(key, 2 + nCZ)
    Lk0_w, Lk0_b = linear_init(keys[0], ich, ck)
    Lk1_w, Lk1_b = linear_init(keys[1], ck, ich)

    czs = []
    for i in range(nCZ):
        ks = jax.random.split(keys[2 + i], 7)
        T0_w, T0_b = linear_init(ks[0], k, k)
        czs.append(dict(
            L=L, k=k, modes=alpha,
            ec_s=ec_s, ec_d=ec_d, rc_e=rc_e, rc_o=rc_o,
            T0_w=T0_w, T0_b=T0_b,
            A_wr=scale * jax.random.uniform(ks[1], (ck, ck, alpha), jnp.float32),
            A_wi=scale * jax.random.uniform(ks[2], (ck, ck, alpha), jnp.float32),
            B_wr=scale * jax.random.uniform(ks[3], (ck, ck, alpha), jnp.float32),
            B_wi=scale * jax.random.uniform(ks[4], (ck, ck, alpha), jnp.float32),
            C_wr=scale * jax.random.uniform(ks[5], (ck, ck, alpha), jnp.float32),
            C_wi=scale * jax.random.uniform(ks[6], (ck, ck, alpha), jnp.float32),
        ))
    return dict(ich=ich, k=k, c=c, nCZ=nCZ, L=L,
                Lk0_w=Lk0_w, Lk0_b=Lk0_b, Lk1_w=Lk1_w, Lk1_b=Lk1_b, czs=czs)


# ----------------------------------------------------------------------------
# Demo / self-check
# ----------------------------------------------------------------------------
if __name__ == "__main__":
    key = jax.random.PRNGKey(0)
    kq, kk, kv, kp = jax.random.split(key, 4)

    # Small shapes consistent with the module: queries/keys/values are (B, L, H, E/D)
    B, L, H, E = 2, 8, 2, 4
    S, D = 8, 4
    ich = H * D                       # Lk0 input dim must equal H*D
    k_wav, alpha, c, nCZ, Lvl = 4, 8, 4, 1, 0

    params = init_mwt_params(kp, ich, k_wav, alpha, c, nCZ, Lvl)

    queries = jax.random.normal(kq, (B, L, H, E), jnp.float32)
    keys_in = jax.random.normal(kk, (B, S, H, E), jnp.float32)
    values = jax.random.normal(kv, (B, S, H, D), jnp.float32)

    # jit with params closed over so python ints (L, modes, ...) stay static.
    fwd_pallas = jax.jit(lambda q, kz, v: multi_wavelet_transform_forward(
        q, kz, v, None, params, use_pallas=True)[0])
    fwd_ref = jax.jit(lambda q, kz, v: multi_wavelet_transform_forward(
        q, kz, v, None, params, use_pallas=False)[0])

    out = jax.block_until_ready(fwd_pallas(queries, keys_in, values))
    ref = jax.block_until_ready(fwd_ref(queries, keys_in, values))

    assert out.shape == (B, L, ich // D, D), out.shape
    err = float(jnp.max(jnp.abs(out - ref)))
    # Tolerance covers MXU f32 multi-pass vs XLA HIGHEST-precision reference.
    assert err < 2e-2, f"max abs error vs reference: {err}"

    print("KERNEL_OK")
</pallas_src>

<mosaic_0001>
module attributes {stable_mosaic.version = 11 : i64} {
  func.func @_linear_bias_kernel(%arg0: i32, %arg1: memref<16x8xf32, #tpu.memory_space<vmem>>, %arg2: memref<8x16xf32, #tpu.memory_space<vmem>>, %arg3: memref<1x16xf32, #tpu.memory_space<vmem>>, %arg4: memref<16x16xf32, #tpu.memory_space<vmem>>) attributes {dimension_semantics = [#tpu.dimension_semantics<parallel>], iteration_bounds = array<i64: 1>, scalar_prefetch = 0 : i64, scratch_operands = 0 : i64, tpu.core_type = #tpu.core_type<tc>, window_params = [{transform_indices = @transform_0, window_bounds = array<i64: 16, 8>}, {pipeline_mode = #tpu.pipeline_mode<synchronous>, transform_indices = @transform_1, window_bounds = array<i64: 8, 16>}, {pipeline_mode = #tpu.pipeline_mode<synchronous>, transform_indices = @transform_2, window_bounds = array<i64: 1, 16>}, {transform_indices = @transform_3, window_bounds = array<i64: 16, 16>}]} {
    %c0 = arith.constant 0 : index
    %c0_0 = arith.constant 0 : index
    %0 = vector.load %arg1[%c0, %c0_0] : memref<16x8xf32, #tpu.memory_space<vmem>>, vector<16x8xf32>
    %c0_1 = arith.constant 0 : index
    %c0_2 = arith.constant 0 : index
    %1 = vector.load %arg2[%c0_1, %c0_2] : memref<8x16xf32, #tpu.memory_space<vmem>>, vector<8x16xf32>
    %cst = arith.constant dense<0.000000e+00> : vector<16x16xf32>
    %2 = tpu.matmul %0, %1, %cst {dimension_numbers = #tpu.dot_dimension_numbers<[1], [0], [0], [1], [0, 0, 1, 1], [], []>} : vector<16x8xf32>, vector<8x16xf32>, vector<16x16xf32> -> vector<16x16xf32>
    %c0_3 = arith.constant 0 : index
    %c0_4 = arith.constant 0 : index
    %3 = vector.load %arg3[%c0_3, %c0_4] : memref<1x16xf32, #tpu.memory_space<vmem>>, vector<1x16xf32>
    %4 = vector.broadcast %3 : vector<1x16xf32> to vector<16x16xf32>
    %5 = arith.addf %2, %4 : vector<16x16xf32>
    %c0_5 = arith.constant 0 : index
    %c0_6 = arith.constant 0 : index
    %6 = vector.load %arg4[%c0_5, %c0_6] : memref<16x16xf32, #tpu.memory_space<vmem>>, vector<16x16xf32>
    tpu.vector_store %arg4[%c0_5, %c0_6], %5 {strides = array<i32>} : memref<16x16xf32, #tpu.memory_space<vmem>>, vector<16x16xf32>,
    return
  }
  func.func @transform_0(%arg0: i32) -> (i32, i32) {
    %c0_i32 = arith.constant 0 : i32
    %c0_i32_0 = arith.constant 0 : i32
    return %arg0, %c0_i32 : i32, i32
  }
  func.func @transform_1(%arg0: i32) -> (i32, i32) {
    %c0_i32 = arith.constant 0 : i32
    %c0_i32_0 = arith.constant 0 : i32
    %c0_i32_1 = arith.constant 0 : i32
    return %c0_i32, %c0_i32_0 : i32, i32
  }
  func.func @transform_2(%arg0: i32) -> (i32, i32) {
    %c0_i32 = arith.constant 0 : i32
    %c0_i32_0 = arith.constant 0 : i32
    %c0_i32_1 = arith.constant 0 : i32
    return %c0_i32, %c0_i32_0 : i32, i32
  }
  func.func @transform_3(%arg0: i32) -> (i32, i32) {
    %c0_i32 = arith.constant 0 : i32
    %c0_i32_0 = arith.constant 0 : i32
    return %arg0, %c0_i32 : i32, i32
  }
}

module attributes {stable_mosaic.version = 11 : i64} {
  func.func @_linear_bias_kernel(%arg0: i32, %arg1: memref<32x8xf32, #tpu.memory_space<vmem>>, %arg2: memref<8x8xf32, #tpu.memory_space<vmem>>, %arg3: memref<1x8xf32, #tpu.memory_space<vmem>>, %arg4: memref<32x8xf32, #tpu.memory_space<vmem>>) attributes {dimension_semantics = [#tpu.dimension_semantics<parallel>], iteration_bounds = array<i64: 1>, scalar_prefetch = 0 : i64, scratch_operands = 0 : i64, tpu.core_type = #tpu.core_type<tc>, window_params = [{transform_indices = @transform_0, window_bounds = array<i64: 32, 8>}, {pipeline_mode = #tpu.pipeline_mode<synchronous>, transform_indices = @transform_1, window_bounds = array<i64: 8, 8>}, {pipeline_mode = #tpu.pipeline_mode<synchronous>, transform_indices = @transform_2, window_bounds = array<i64: 1, 8>}, {transform_indices = @transform_3, window_bounds = array<i64: 32, 8>}]} {
    %c0 = arith.constant 0 : index
    %c0_0 = arith.constant 0 : index
    %0 = vector.load %arg1[%c0, %c0_0] : memref<32x8xf32, #tpu.memory_space<vmem>>, vector<32x8xf32>
    %c0_1 = arith.constant 0 : index
    %c0_2 = arith.constant 0 : index
    %1 = vector.load %arg2[%c0_1, %c0_2] : memref<8x8xf32, #tpu.memory_space<vmem>>, vector<8x8xf32>
    %cst = arith.constant dense<0.000000e+00> : vector<32x8xf32>
    %2 = tpu.matmul %0, %1, %cst {dimension_numbers = #tpu.dot_dimension_numbers<[1], [0], [0], [1], [0, 0, 1, 1], [], []>} : vector<32x8xf32>, vector<8x8xf32>, vector<32x8xf32> -> vector<32x8xf32>
    %c0_3 = arith.constant 0 : index
    %c0_4 = arith.constant 0 : index
    %3 = vector.load %arg3[%c0_3, %c0_4] : memref<1x8xf32, #tpu.memory_space<vmem>>, vector<1x8xf32>
    %4 = vector.broadcast %3 : vector<1x8xf32> to vector<32x8xf32>
    %5 = arith.addf %2, %4 : vector<32x8xf32>
    %c0_5 = arith.constant 0 : index
    %c0_6 = arith.constant 0 : index
    %6 = vector.load %arg4[%c0_5, %c0_6] : memref<32x8xf32, #tpu.memory_space<vmem>>, vector<32x8xf32>
    tpu.vector_store %arg4[%c0_5, %c0_6], %5 {strides = array<i32>} : memref<32x8xf32, #tpu.memory_space<vmem>>, vector<32x8xf32>,
    return
  }
  func.func @transform_0(%arg0: i32) -> (i32, i32) {
    %c0_i32 = arith.constant 0 : i32
    %c0_i32_0 = arith.constant 0 : i32
    return %arg0, %c0_i32 : i32, i32
  }
  func.func @transform_1(%arg0: i32) -> (i32, i32) {
    %c0_i32 = arith.constant 0 : i32
    %c0_i32_0 = arith.constant 0 : i32
    %c0_i32_1 = arith.constant 0 : i32
    return %c0_i32, %c0_i32_0 : i32, i32
  }
  func.func @transform_2(%arg0: i32) -> (i32, i32) {
    %c0_i32 = arith.constant 0 : i32
    %c0_i32_0 = arith.constant 0 : i32
    %c0_i32_1 = arith.constant 0 : i32
    return %c0_i32, %c0_i32_0 : i32, i32
  }
  func.func @transform_3(%arg0: i32) -> (i32, i32) {
    %c0_i32 = arith.constant 0 : i32
    %c0_i32_0 = arith.constant 0 : i32
    return %arg0, %c0_i32 : i32, i32
  }
}

module attributes {stable_mosaic.version = 11 : i64} {
  func.func @_complex_mix_kernel(%arg0: i32, %arg1: memref<1x2x64xf32, #tpu.memory_space<vmem>>, %arg2: memref<1x64x64xf32, #tpu.memory_space<vmem>>, %arg3: memref<1x2x64xf32, #tpu.memory_space<vmem>>) attributes {dimension_semantics = [#tpu.dimension_semantics<parallel>], iteration_bounds = array<i64: 3>, scalar_prefetch = 0 : i64, scratch_operands = 0 : i64, tpu.core_type = #tpu.core_type<tc>, window_params = [{transform_indices = @transform_0, window_bounds = array<i64: 1, 2, 64>}, {transform_indices = @transform_1, window_bounds = array<i64: 1, 64, 64>}, {transform_indices = @transform_2, window_bounds = array<i64: 1, 2, 64>}]} {
    %c0 = arith.constant 0 : index
    %c0_0 = arith.constant 0 : index
    %c0_1 = arith.constant 0 : index
    %0 = vector.load %arg1[%c0, %c0_0, %c0_1] : memref<1x2x64xf32, #tpu.memory_space<vmem>>, vector<1x2x64xf32>
    %1 = vector.shape_cast %0 : vector<1x2x64xf32> to vector<2x64xf32>
    %c0_2 = arith.constant 0 : index
    %c0_3 = arith.constant 0 : index
    %c0_4 = arith.constant 0 : index
    %2 = vector.load %arg2[%c0_2, %c0_3, %c0_4] : memref<1x64x64xf32, #tpu.memory_space<vmem>>, vector<1x64x64xf32>
    %3 = vector.shape_cast %2 : vector<1x64x64xf32> to vector<64x64xf32>
    %cst = arith.constant dense<0.000000e+00> : vector<2x64xf32>
    %4 = tpu.matmul %1, %3, %cst {dimension_numbers = #tpu.dot_dimension_numbers<[1], [0], [0], [1], [0, 0, 1, 1], [], []>} : vector<2x64xf32>, vector<64x64xf32>, vector<2x64xf32> -> vector<2x64xf32>
    %c0_5 = arith.constant 0 : index
    %c0_6 = arith.constant 0 : index
    %c0_7 = arith.constant 0 : index
    %5 = vector.load %arg3[%c0_5, %c0_6, %c0_7] : memref<1x2x64xf32, #tpu.memory_space<vmem>>, vector<1x2x64xf32>
    %6 = vector.shape_cast %5 : vector<1x2x64xf32> to vector<2x64xf32>
    %7 = vector.shape_cast %4 : vector<2x64xf32> to vector<1x2x64xf32>
    tpu.vector_store %arg3[%c0_5, %c0_6, %c0_7], %7 {strides = array<i32>} : memref<1x2x64xf32, #tpu.memory_space<vmem>>, vector<1x2x64xf32>,
    return
  }
  func.func @transform_0(%arg0: i32) -> (i32, i32, i32) {
    %c0_i32 = arith.constant 0 : i32
    %c0_i32_0 = arith.constant 0 : i32
    %c0_i32_1 = arith.constant 0 : i32
    return %arg0, %c0_i32, %c0_i32_0 : i32, i32, i32
  }
  func.func @transform_1(%arg0: i32) -> (i32, i32, i32) {
    %c0_i32 = arith.constant 0 : i32
    %c0_i32_0 = arith.constant 0 : i32
    %c0_i32_1 = arith.constant 0 : i32
    return %arg0, %c0_i32, %c0_i32_0 : i32, i32, i32
  }
  func.func @transform_2(%arg0: i32) -> (i32, i32, i32) {
    %c0_i32 = arith.constant 0 : i32
    %c0_i32_0 = arith.constant 0 : i32
    %c0_i32_1 = arith.constant 0 : i32
    return %arg0, %c0_i32, %c0_i32_0 : i32, i32, i32
  }
}

module attributes {stable_mosaic.version = 11 : i64} {
  func.func @_linear_bias_kernel(%arg0: i32, %arg1: memref<16x8xf32, #tpu.memory_space<vmem>>, %arg2: memref<8x8xf32, #tpu.memory_space<vmem>>, %arg3: memref<1x8xf32, #tpu.memory_space<vmem>>, %arg4: memref<16x8xf32, #tpu.memory_space<vmem>>) attributes {dimension_semantics = [#tpu.dimension_semantics<parallel>], iteration_bounds = array<i64: 1>, scalar_prefetch = 0 : i64, scratch_operands = 0 : i64, tpu.core_type = #tpu.core_type<tc>, window_params = [{transform_indices = @transform_0, window_bounds = array<i64: 16, 8>}, {pipeline_mode = #tpu.pipeline_mode<synchronous>, transform_indices = @transform_1, window_bounds = array<i64: 8, 8>}, {pipeline_mode = #tpu.pipeline_mode<synchronous>, transform_indices = @transform_2, window_bounds = array<i64: 1, 8>}, {transform_indices = @transform_3, window_bounds = array<i64: 16, 8>}]} {
    %c0 = arith.constant 0 : index
    %c0_0 = arith.constant 0 : index
    %0 = vector.load %arg1[%c0, %c0_0] : memref<16x8xf32, #tpu.memory_space<vmem>>, vector<16x8xf32>
    %c0_1 = arith.constant 0 : index
    %c0_2 = arith.constant 0 : index
    %1 = vector.load %arg2[%c0_1, %c0_2] : memref<8x8xf32, #tpu.memory_space<vmem>>, vector<8x8xf32>
    %cst = arith.constant dense<0.000000e+00> : vector<16x8xf32>
    %2 = tpu.matmul %0, %1, %cst {dimension_numbers = #tpu.dot_dimension_numbers<[1], [0], [0], [1], [0, 0, 1, 1], [], []>} : vector<16x8xf32>, vector<8x8xf32>, vector<16x8xf32> -> vector<16x8xf32>
    %c0_3 = arith.constant 0 : index
    %c0_4 = arith.constant 0 : index
    %3 = vector.load %arg3[%c0_3, %c0_4] : memref<1x8xf32, #tpu.memory_space<vmem>>, vector<1x8xf32>
    %4 = vector.broadcast %3 : vector<1x8xf32> to vector<16x8xf32>
    %5 = arith.addf %2, %4 : vector<16x8xf32>
    %c0_5 = arith.constant 0 : index
    %c0_6 = arith.constant 0 : index
    %6 = vector.load %arg4[%c0_5, %c0_6] : memref<16x8xf32, #tpu.memory_space<vmem>>, vector<16x8xf32>
    tpu.vector_store %arg4[%c0_5, %c0_6], %5 {strides = array<i32>} : memref<16x8xf32, #tpu.memory_space<vmem>>, vector<16x8xf32>,
    return
  }
  func.func @transform_0(%arg0: i32) -> (i32, i32) {
    %c0_i32 = arith.constant 0 : i32
    %c0_i32_0 = arith.constant 0 : i32
    return %arg0, %c0_i32 : i32, i32
  }
  func.func @transform_1(%arg0: i32) -> (i32, i32) {
    %c0_i32 = arith.constant 0 : i32
    %c0_i32_0 = arith.constant 0 : i32
    %c0_i32_1 = arith.constant 0 : i32
    return %c0_i32, %c0_i32_0 : i32, i32
  }
  func.func @transform_2(%arg0: i32) -> (i32, i32) {
    %c0_i32 = arith.constant 0 : i32
    %c0_i32_0 = arith.constant 0 : i32
    %c0_i32_1 = arith.constant 0 : i32
    return %c0_i32, %c0_i32_0 : i32, i32
  }
  func.func @transform_3(%arg0: i32) -> (i32, i32) {
    %c0_i32 = arith.constant 0 : i32
    %c0_i32_0 = arith.constant 0 : i32
    return %arg0, %c0_i32 : i32, i32
  }
}

module attributes {stable_mosaic.version = 11 : i64} {
  func.func @_complex_mix_kernel(%arg0: i32, %arg1: memref<1x2x64xf32, #tpu.memory_space<vmem>>, %arg2: memref<1x64x64xf32, #tpu.memory_space<vmem>>, %arg3: memref<1x2x64xf32, #tpu.memory_space<vmem>>) attributes {dimension_semantics = [#tpu.dimension_semantics<parallel>], iteration_bounds = array<i64: 2>, scalar_prefetch = 0 : i64, scratch_operands = 0 : i64, tpu.core_type = #tpu.core_type<tc>, window_params = [{transform_indices = @transform_0, window_bounds = array<i64: 1, 2, 64>}, {transform_indices = @transform_1, window_bounds = array<i64: 1, 64, 64>}, {transform_indices = @transform_2, window_bounds = array<i64: 1, 2, 64>}]} {
    %c0 = arith.constant 0 : index
    %c0_0 = arith.constant 0 : index
    %c0_1 = arith.constant 0 : index
    %0 = vector.load %arg1[%c0, %c0_0, %c0_1] : memref<1x2x64xf32, #tpu.memory_space<vmem>>, vector<1x2x64xf32>
    %1 = vector.shape_cast %0 : vector<1x2x64xf32> to vector<2x64xf32>
    %c0_2 = arith.constant 0 : index
    %c0_3 = arith.constant 0 : index
    %c0_4 = arith.constant 0 : index
    %2 = vector.load %arg2[%c0_2, %c0_3, %c0_4] : memref<1x64x64xf32, #tpu.memory_space<vmem>>, vector<1x64x64xf32>
    %3 = vector.shape_cast %2 : vector<1x64x64xf32> to vector<64x64xf32>
    %cst = arith.constant dense<0.000000e+00> : vector<2x64xf32>
    %4 = tpu.matmul %1, %3, %cst {dimension_numbers = #tpu.dot_dimension_numbers<[1], [0], [0], [1], [0, 0, 1, 1], [], []>} : vector<2x64xf32>, vector<64x64xf32>, vector<2x64xf32> -> vector<2x64xf32>
    %c0_5 = arith.constant 0 : index
    %c0_6 = arith.constant 0 : index
    %c0_7 = arith.constant 0 : index
    %5 = vector.load %arg3[%c0_5, %c0_6, %c0_7] : memref<1x2x64xf32, #tpu.memory_space<vmem>>, vector<1x2x64xf32>
    %6 = vector.shape_cast %5 : vector<1x2x64xf32> to vector<2x64xf32>
    %7 = vector.shape_cast %4 : vector<2x64xf32> to vector<1x2x64xf32>
    tpu.vector_store %arg3[%c0_5, %c0_6, %c0_7], %7 {strides = array<i32>} : memref<1x2x64xf32, #tpu.memory_space<vmem>>, vector<1x2x64xf32>,
    return
  }
  func.func @transform_0(%arg0: i32) -> (i32, i32, i32) {
    %c0_i32 = arith.constant 0 : i32
    %c0_i32_0 = arith.constant 0 : i32
    %c0_i32_1 = arith.constant 0 : i32
    return %arg0, %c0_i32, %c0_i32_0 : i32, i32, i32
  }
  func.func @transform_1(%arg0: i32) -> (i32, i32, i32) {
    %c0_i32 = arith.constant 0 : i32
    %c0_i32_0 = arith.constant 0 : i32
    %c0_i32_1 = arith.constant 0 : i32
    return %arg0, %c0_i32, %c0_i32_0 : i32, i32, i32
  }
  func.func @transform_2(%arg0: i32) -> (i32, i32, i32) {
    %c0_i32 = arith.constant 0 : i32
    %c0_i32_0 = arith.constant 0 : i32
    %c0_i32_1 = arith.constant 0 : i32
    return %arg0, %c0_i32, %c0_i32_0 : i32, i32, i32
  }
}

module attributes {stable_mosaic.version = 11 : i64} {
  func.func @_complex_mix_kernel(%arg0: i32, %arg1: memref<1x2x64xf32, #tpu.memory_space<vmem>>, %arg2: memref<1x64x64xf32, #tpu.memory_space<vmem>>, %arg3: memref<1x2x64xf32, #tpu.memory_space<vmem>>) attributes {dimension_semantics = [#tpu.dimension_semantics<parallel>], iteration_bounds = array<i64: 1>, scalar_prefetch = 0 : i64, scratch_operands = 0 : i64, tpu.core_type = #tpu.core_type<tc>, window_params = [{transform_indices = @transform_0, window_bounds = array<i64: 1, 2, 64>}, {transform_indices = @transform_1, window_bounds = array<i64: 1, 64, 64>}, {transform_indices = @transform_2, window_bounds = array<i64: 1, 2, 64>}]} {
    %c0 = arith.constant 0 : index
    %c0_0 = arith.constant 0 : index
    %c0_1 = arith.constant 0 : index
    %0 = vector.load %arg1[%c0, %c0_0, %c0_1] : memref<1x2x64xf32, #tpu.memory_space<vmem>>, vector<1x2x64xf32>
    %1 = vector.shape_cast %0 : vector<1x2x64xf32> to vector<2x64xf32>
    %c0_2 = arith.constant 0 : index
    %c0_3 = arith.constant 0 : index
    %c0_4 = arith.constant 0 : index
    %2 = vector.load %arg2[%c0_2, %c0_3, %c0_4] : memref<1x64x64xf32, #tpu.memory_space<vmem>>, vector<1x64x64xf32>
    %3 = vector.shape_cast %2 : vector<1x64x64xf32> to vector<64x64xf32>
    %cst = arith.constant dense<0.000000e+00> : vector<2x64xf32>
    %4 = tpu.matmul %1, %3, %cst {dimension_numbers = #tpu.dot_dimension_numbers<[1], [0], [0], [1], [0, 0, 1, 1], [], []>} : vector<2x64xf32>, vector<64x64xf32>, vector<2x64xf32> -> vector<2x64xf32>
    %c0_5 = arith.constant 0 : index
    %c0_6 = arith.constant 0 : index
    %c0_7 = arith.constant 0 : index
    %5 = vector.load %arg3[%c0_5, %c0_6, %c0_7] : memref<1x2x64xf32, #tpu.memory_space<vmem>>, vector<1x2x64xf32>
    %6 = vector.shape_cast %5 : vector<1x2x64xf32> to vector<2x64xf32>
    %7 = vector.shape_cast %4 : vector<2x64xf32> to vector<1x2x64xf32>
    tpu.vector_store %arg3[%c0_5, %c0_6, %c0_7], %7 {strides = array<i32>} : memref<1x2x64xf32, #tpu.memory_space<vmem>>, vector<1x2x64xf32>,
    return
  }
  func.func @transform_0(%arg0: i32) -> (i32, i32, i32) {
    %c0_i32 = arith.constant 0 : i32
    %c0_i32_0 = arith.constant 0 : i32
    %c0_i32_1 = arith.constant 0 : i32
    return %arg0, %c0_i32, %c0_i32_0 : i32, i32, i32
  }
  func.func @transform_1(%arg0: i32) -> (i32, i32, i32) {
    %c0_i32 = arith.constant 0 : i32
    %c0_i32_0 = arith.constant 0 : i32
    %c0_i32_1 = arith.constant 0 : i32
    return %arg0, %c0_i32, %c0_i32_0 : i32, i32, i32
  }
  func.func @transform_2(%arg0: i32) -> (i32, i32, i32) {
    %c0_i32 = arith.constant 0 : i32
    %c0_i32_0 = arith.constant 0 : i32
    %c0_i32_1 = arith.constant 0 : i32
    return %arg0, %c0_i32, %c0_i32_0 : i32, i32, i32
  }
}

module attributes {stable_mosaic.version = 11 : i64} {
  func.func @_linear_bias_kernel(%arg0: i32, %arg1: memref<8x8xf32, #tpu.memory_space<vmem>>, %arg2: memref<8x8xf32, #tpu.memory_space<vmem>>, %arg3: memref<1x8xf32, #tpu.memory_space<vmem>>, %arg4: memref<8x8xf32, #tpu.memory_space<vmem>>) attributes {dimension_semantics = [#tpu.dimension_semantics<parallel>], iteration_bounds = array<i64: 1>, scalar_prefetch = 0 : i64, scratch_operands = 0 : i64, tpu.core_type = #tpu.core_type<tc>, window_params = [{transform_indices = @transform_0, window_bounds = array<i64: 8, 8>}, {pipeline_mode = #tpu.pipeline_mode<synchronous>, transform_indices = @transform_1, window_bounds = array<i64: 8, 8>}, {pipeline_mode = #tpu.pipeline_mode<synchronous>, transform_indices = @transform_2, window_bounds = array<i64: 1, 8>}, {transform_indices = @transform_3, window_bounds = array<i64: 8, 8>}]} {
    %c0 = arith.constant 0 : index
    %c0_0 = arith.constant 0 : index
    %0 = vector.load %arg1[%c0, %c0_0] : memref<8x8xf32, #tpu.memory_space<vmem>>, vector<8x8xf32>
    %c0_1 = arith.constant 0 : index
    %c0_2 = arith.constant 0 : index
    %1 = vector.load %arg2[%c0_1, %c0_2] : memref<8x8xf32, #tpu.memory_space<vmem>>, vector<8x8xf32>
    %cst = arith.constant dense<0.000000e+00> : vector<8x8xf32>
    %2 = tpu.matmul %0, %1, %cst {dimension_numbers = #tpu.dot_dimension_numbers<[1], [0], [0], [1], [0, 0, 1, 1], [], []>} : vector<8x8xf32>, vector<8x8xf32>, vector<8x8xf32> -> vector<8x8xf32>
    %c0_3 = arith.constant 0 : index
    %c0_4 = arith.constant 0 : index
    %3 = vector.load %arg3[%c0_3, %c0_4] : memref<1x8xf32, #tpu.memory_space<vmem>>, vector<1x8xf32>
    %4 = vector.broadcast %3 : vector<1x8xf32> to vector<8x8xf32>
    %5 = arith.addf %2, %4 : vector<8x8xf32>
    %c0_5 = arith.constant 0 : index
    %c0_6 = arith.constant 0 : index
    %6 = vector.load %arg4[%c0_5, %c0_6] : memref<8x8xf32, #tpu.memory_space<vmem>>, vector<8x8xf32>
    tpu.vector_store %arg4[%c0_5, %c0_6], %5 {strides = array<i32>} : memref<8x8xf32, #tpu.memory_space<vmem>>, vector<8x8xf32>,
    return
  }
  func.func @transform_0(%arg0: i32) -> (i32, i32) {
    %c0_i32 = arith.constant 0 : i32
    %c0_i32_0 = arith.constant 0 : i32
    return %arg0, %c0_i32 : i32, i32
  }
  func.func @transform_1(%arg0: i32) -> (i32, i32) {
    %c0_i32 = arith.constant 0 : i32
    %c0_i32_0 = arith.constant 0 : i32
    %c0_i32_1 = arith.constant 0 : i32
    return %c0_i32, %c0_i32_0 : i32, i32
  }
  func.func @transform_2(%arg0: i32) -> (i32, i32) {
    %c0_i32 = arith.constant 0 : i32
    %c0_i32_0 = arith.constant 0 : i32
    %c0_i32_1 = arith.constant 0 : i32
    return %c0_i32, %c0_i32_0 : i32, i32
  }
  func.func @transform_3(%arg0: i32) -> (i32, i32) {
    %c0_i32 = arith.constant 0 : i32
    %c0_i32_0 = arith.constant 0 : i32
    return %arg0, %c0_i32 : i32, i32
  }
}

module attributes {stable_mosaic.version = 11 : i64} {
  func.func @_linear_bias_kernel(%arg0: i32, %arg1: memref<8x4xf32, #tpu.memory_space<vmem>>, %arg2: memref<4x4xf32, #tpu.memory_space<vmem>>, %arg3: memref<1x4xf32, #tpu.memory_space<vmem>>, %arg4: memref<8x4xf32, #tpu.memory_space<vmem>>) attributes {dimension_semantics = [#tpu.dimension_semantics<parallel>], iteration_bounds = array<i64: 1>, scalar_prefetch = 0 : i64, scratch_operands = 0 : i64, tpu.core_type = #tpu.core_type<tc>, window_params = [{transform_indices = @transform_0, window_bounds = array<i64: 8, 4>}, {pipeline_mode = #tpu.pipeline_mode<synchronous>, transform_indices = @transform_1, window_bounds = array<i64: 4, 4>}, {pipeline_mode = #tpu.pipeline_mode<synchronous>, transform_indices = @transform_2, window_bounds = array<i64: 1, 4>}, {transform_indices = @transform_3, window_bounds = array<i64: 8, 4>}]} {
    %c0 = arith.constant 0 : index
    %c0_0 = arith.constant 0 : index
    %0 = vector.load %arg1[%c0, %c0_0] : memref<8x4xf32, #tpu.memory_space<vmem>>, vector<8x4xf32>
    %c0_1 = arith.constant 0 : index
    %c0_2 = arith.constant 0 : index
    %1 = vector.load %arg2[%c0_1, %c0_2] : memref<4x4xf32, #tpu.memory_space<vmem>>, vector<4x4xf32>
    %cst = arith.constant dense<0.000000e+00> : vector<8x4xf32>
    %2 = tpu.matmul %0, %1, %cst {dimension_numbers = #tpu.dot_dimension_numbers<[1], [0], [0], [1], [0, 0, 1, 1], [], []>} : vector<8x4xf32>, vector<4x4xf32>, vector<8x4xf32> -> vector<8x4xf32>
    %c0_3 = arith.constant 0 : index
    %c0_4 = arith.constant 0 : index
    %3 = vector.load %arg3[%c0_3, %c0_4] : memref<1x4xf32, #tpu.memory_space<vmem>>, vector<1x4xf32>
    %4 = vector.broadcast %3 : vector<1x4xf32> to vector<8x4xf32>
    %5 = arith.addf %2, %4 : vector<8x4xf32>
    %c0_5 = arith.constant 0 : index
    %c0_6 = arith.constant 0 : index
    %6 = vector.load %arg4[%c0_5, %c0_6] : memref<8x4xf32, #tpu.memory_space<vmem>>, vector<8x4xf32>
    tpu.vector_store %arg4[%c0_5, %c0_6], %5 {strides = array<i32>} : memref<8x4xf32, #tpu.memory_space<vmem>>, vector<8x4xf32>,
    return
  }
  func.func @transform_0(%arg0: i32) -> (i32, i32) {
    %c0_i32 = arith.constant 0 : i32
    %c0_i32_0 = arith.constant 0 : i32
    return %arg0, %c0_i32 : i32, i32
  }
  func.func @transform_1(%arg0: i32) -> (i32, i32) {
    %c0_i32 = arith.constant 0 : i32
    %c0_i32_0 = arith.constant 0 : i32
    %c0_i32_1 = arith.constant 0 : i32
    return %c0_i32, %c0_i32_0 : i32, i32
  }
  func.func @transform_2(%arg0: i32) -> (i32, i32) {
    %c0_i32 = arith.constant 0 : i32
    %c0_i32_0 = arith.constant 0 : i32
    %c0_i32_1 = arith.constant 0 : i32
    return %c0_i32, %c0_i32_0 : i32, i32
  }
  func.func @transform_3(%arg0: i32) -> (i32, i32) {
    %c0_i32 = arith.constant 0 : i32
    %c0_i32_0 = arith.constant 0 : i32
    return %arg0, %c0_i32 : i32, i32
  }
}

module attributes {stable_mosaic.version = 11 : i64} {
  func.func @_linear_bias_kernel(%arg0: i32, %arg1: memref<16x16xf32, #tpu.memory_space<vmem>>, %arg2: memref<16x8xf32, #tpu.memory_space<vmem>>, %arg3: memref<1x8xf32, #tpu.memory_space<vmem>>, %arg4: memref<16x8xf32, #tpu.memory_space<vmem>>) attributes {dimension_semantics = [#tpu.dimension_semantics<parallel>], iteration_bounds = array<i64: 1>, scalar_prefetch = 0 : i64, scratch_operands = 0 : i64, tpu.core_type = #tpu.core_type<tc>, window_params = [{transform_indices = @transform_0, window_bounds = array<i64: 16, 16>}, {pipeline_mode = #tpu.pipeline_mode<synchronous>, transform_indices = @transform_1, window_bounds = array<i64: 16, 8>}, {pipeline_mode = #tpu.pipeline_mode<synchronous>, transform_indices = @transform_2, window_bounds = array<i64: 1, 8>}, {transform_indices = @transform_3, window_bounds = array<i64: 16, 8>}]} {
    %c0 = arith.constant 0 : index
    %c0_0 = arith.constant 0 : index
    %0 = vector.load %arg1[%c0, %c0_0] : memref<16x16xf32, #tpu.memory_space<vmem>>, vector<16x16xf32>
    %c0_1 = arith.constant 0 : index
    %c0_2 = arith.constant 0 : index
    %1 = vector.load %arg2[%c0_1, %c0_2] : memref<16x8xf32, #tpu.memory_space<vmem>>, vector<16x8xf32>
    %cst = arith.constant dense<0.000000e+00> : vector<16x8xf32>
    %2 = tpu.matmul %0, %1, %cst {dimension_numbers = #tpu.dot_dimension_numbers<[1], [0], [0], [1], [0, 0, 1, 1], [], []>} : vector<16x16xf32>, vector<16x8xf32>, vector<16x8xf32> -> vector<16x8xf32>
    %c0_3 = arith.constant 0 : index
    %c0_4 = arith.constant 0 : index
    %3 = vector.load %arg3[%c0_3, %c0_4] : memref<1x8xf32, #tpu.memory_space<vmem>>, vector<1x8xf32>
    %4 = vector.broadcast %3 : vector<1x8xf32> to vector<16x8xf32>
    %5 = arith.addf %2, %4 : vector<16x8xf32>
    %c0_5 = arith.constant 0 : index
    %c0_6 = arith.constant 0 : index
    %6 = vector.load %arg4[%c0_5, %c0_6] : memref<16x8xf32, #tpu.memory_space<vmem>>, vector<16x8xf32>
    tpu.vector_store %arg4[%c0_5, %c0_6], %5 {strides = array<i32>} : memref<16x8xf32, #tpu.memory_space<vmem>>, vector<16x8xf32>,
    return
  }
  func.func @transform_0(%arg0: i32) -> (i32, i32) {
    %c0_i32 = arith.constant 0 : i32
    %c0_i32_0 = arith.constant 0 : i32
    return %arg0, %c0_i32 : i32, i32
  }
  func.func @transform_1(%arg0: i32) -> (i32, i32) {
    %c0_i32 = arith.constant 0 : i32
    %c0_i32_0 = arith.constant 0 : i32
    %c0_i32_1 = arith.constant 0 : i32
    return %c0_i32, %c0_i32_0 : i32, i32
  }
  func.func @transform_2(%arg0: i32) -> (i32, i32) {
    %c0_i32 = arith.constant 0 : i32
    %c0_i32_0 = arith.constant 0 : i32
    %c0_i32_1 = arith.constant 0 : i32
    return %c0_i32, %c0_i32_0 : i32, i32
  }
  func.func @transform_3(%arg0: i32) -> (i32, i32) {
    %c0_i32 = arith.constant 0 : i32
    %c0_i32_0 = arith.constant 0 : i32
    return %arg0, %c0_i32 : i32, i32
  }
}

</mosaic_0001>

<llo_original>
// kernel: _lambda_.12
$region0: #{_lambda_.12}
  #allocation0 [shape = 'u32[]', space=smem, size = 0x4, offset = 0x4, fixed_abs, tag = 'smem constant byte address 0x4 - core index']
  #allocation1 [shape = 'u32[144,128]{1,0:T(1,128)}', space=vmem, size = 0x12000, scoped, tag = 'internal scratch']
  %s0 = inlined_call_operand.vmem [shape: f32[16,8], index: 0, kind: input, shape index: {}]
  %s1 = inlined_call_operand.vmem [shape: f32[8,16], index: 1, kind: input, shape index: {}]
  %s2 = inlined_call_operand.vmem [shape: f32[1,16], index: 2, kind: input, shape index: {}]
  %s3 = inlined_call_operand.vmem [shape: f32[16,16], index: 3, kind: output, shape index: {}]
  %s4 = sld [smem:[#allocation0]]
  $region22: #{_lambda_.12} parent=0
    _
  %s6 = ssub.s32 1, %s4
  %s7 = scalar_select 0, %s6, %s4
  // Predicated region
  $region2: #{_lambda_.12} parent=0 // pred_check
    _
  $region3: #{_lambda_.12} parent=0 // pred_check_branch
    %9 = sbr.rel (0) target = $region5
  $region4: #{_lambda_.12} parent=0 // pred_region
    _
  $region5: #{_lambda_.12} parent=0 // pred_fallthru
    _
  // Predicated region
  $region6: #{_lambda_.12} parent=0 // pred_check
    _
  $region7: #{_lambda_.12} parent=0 // pred_check_branch
    %11 = sbr.rel (0) target = $region9
  $region8: #{_lambda_.12} parent=0 // pred_region
    _
  $region9: #{_lambda_.12} parent=0 // pred_fallthru
    _
  // Predicated region
  $region10: #{_lambda_.12} parent=0 // pred_check
    _
  $region11: #{_lambda_.12} parent=0 // pred_check_branch
    %13 = sbr.rel (0) target = $region13
  $region12: #{_lambda_.12} parent=0 // pred_region
    _
  $region13: #{_lambda_.12} parent=0 // pred_fallthru
    _
  %v14 = vld [vmem:[%s0] sm:$0xff]
  %v15 = vld [vmem:[%s0 + $0x8] sm:$0xff]
  %v16 = vld [vmem:[%s1] sm:$0xff]
  %v17 = vld [vmem:[%s2] sm:$0x1]
  %v19 = vlaneseq
  %v20 = vshrl.u32 %v19, 7
  %v21 = vsub.s32 0, %v20
  %v22 = vrot.slane %v17, %v21
  %vm24 = vcmask 64512
  %v26 = vsel %vm24, %v14, 0
  %v29 = vsel %vm24, %v15, 0
  %31 = vmatprep.subr.mxu0 0.0
  %32 = vmatpush1.msra.mxu0 %v16
  %33 = vmatprep.subr.mxu0 0.0
  %34 = vmatpush1.msra.mxu0 0.0
  %35 = vmatprep.subr.mxu0 0.0
  %36 = vmatpush1.msra.mxu0 0.0
  %37 = vmatprep.subr.mxu0 0.0
  %38 = vmatpush1.msra.mxu0 0.0
  %39 = vmatprep.subr.mxu0 0.0
  %40 = vmatpush1.msra.mxu0 0.0
  %41 = vmatprep.subr.mxu0 0.0
  %42 = vmatpush1.msra.mxu0 0.0
  %43 = vmatprep.subr.mxu0 0.0
  %44 = vmatpush1.msra.mxu0 0.0
  %45 = vmatprep.subr.mxu0 0.0
  %46 = vmatpush1.msra.mxu0 0.0
  %47 = vmatprep.subr.mxu0 0.0
  %48 = vmatpush1.msra.mxu0 0.0
  %49 = vmatprep.subr.mxu0 0.0
  %50 = vmatpush1.msra.mxu0 0.0
  %51 = vmatprep.subr.mxu0 0.0
  %52 = vmatpush1.msra.mxu0 0.0
  %53 = vmatprep.subr.mxu0 0.0
  %54 = vmatpush1.msra.mxu0 0.0
  %55 = vmatprep.subr.mxu0 0.0
  %56 = vmatpush1.msra.mxu0 0.0
  %57 = vmatprep.subr.mxu0 0.0
  %58 = vmatpush1.msra.mxu0 0.0
  %59 = vmatprep.subr.mxu0 0.0
  %60 = vmatpush1.msra.mxu0 0.0
  %61 = vmatprep.subr.mxu0 0.0
  %62 = vmatpush1.msra.mxu0 0.0
  %63 = vmatprep.subr.mxu0 0.0
  %64 = vmatpush1.msra.mxu0 0.0
  %65 = vmatprep.subr.mxu0 0.0
  %66 = vmatpush1.msra.mxu0 0.0
  %67 = vmatprep.subr.mxu0 0.0
  %68 = vmatpush1.msra.mxu0 0.0
  %69 = vmatprep.subr.mxu0 0.0
  %70 = vmatpush1.msra.mxu0 0.0
  %71 = vmatprep.subr.mxu0 0.0
  %72 = vmatpush1.msra.mxu0 0.0
  %73 = vmatprep.subr.mxu0 0.0
  %74 = vmatpush1.msra.mxu0 0.0
  %75 = vmatprep.subr.mxu0 0.0
  %76 = vmatpush1.msra.mxu0 0.0
  %77 = vmatprep.subr.mxu0 0.0
  %78 = vmatpush1.msra.mxu0 0.0
  %79 = vmatprep.subr.mxu0 0.0
  %80 = vmatpush1.msra.mxu0 0.0
  %81 = vmatprep.subr.mxu0 0.0
  %82 = vmatpush1.msra.mxu0 0.0
  %83 = vmatprep.subr.mxu0 0.0
  %84 = vmatpush1.msra.mxu0 0.0
  %85 = vmatprep.subr.mxu0 0.0
  %86 = vmatpush1.msra.mxu0 0.0
  %87 = vmatprep.subr.mxu0 0.0
  %88 = vmatpush1.msra.mxu0 0.0
  %89 = vmatprep.subr.mxu0 0.0
  %90 = vmatpush1.msra.mxu0 0.0
  %91 = vmatprep.subr.mxu0 0.0
  %92 = vmatpush1.msra.mxu0 0.0
  %93 = vmatprep.subr.mxu0 0.0
  %94 = vmatpush1.msra.mxu0 0.0
  %95 = vmatprep.mubr.f32.mxu0 0.0
  %96 = vmatmul.mubr.f32.gmra.mrb[0].mxu0 %v26
  %v97 = vpop.f32.mrb[0].mxu0
  %v98 = vadd.f32 %v22, %v97
  %v99 = vpop.f32.mrb[0].mxu0
  %100 = vmatprep.mubr.f32.mxu0 0.0
  %101 = vmatmul.mubr.f32.gmra.mrb[0].mxu0 %v29
  %v102 = vpop.f32.mrb[0].mxu0
  %v103 = vadd.f32 %v22, %v102
  %v104 = vpop.f32.mrb[0].mxu0
  %105 = vdwg.mxu0
  %vm106 = vcmask 130048
  %107 = vst.msk [vmem:[%s3] sm:$0xff] %vm106, %v98
  %108 = vst.msk [vmem:[%s3 + $0x8] sm:$0xff] %vm106, %v103
  // Predicated region
  $region14: #{_lambda_.12} parent=0 // pred_check
    _
  $region15: #{_lambda_.12} parent=0 // pred_check_branch
    %110 = sbr.rel (0) target = $region17
  $region16: #{_lambda_.12} parent=0 // pred_region
    _
  $region17: #{_lambda_.12} parent=0 // pred_fallthru
    _
  // Predicated region
  $region18: #{_lambda_.12} parent=0 // pred_check
    _
  $region19: #{_lambda_.12} parent=0 // pred_check_branch
    %112 = sbr.rel (0) target = $region21
  $region20: #{_lambda_.12} parent=0 // pred_region
    _
  $region21: #{_lambda_.12} parent=0 // pred_fallthru
    _

// kernel: _lambda_.13
$region0: #{_lambda_.13}
  #allocation0 [shape = 'u32[]', space=smem, size = 0x4, offset = 0x4, fixed_abs, tag = 'smem constant byte address 0x4 - core index']
  #allocation1 [shape = 'u32[144,128]{1,0:T(1,128)}', space=vmem, size = 0x12000, scoped, tag = 'internal scratch']
  %s0 = inlined_call_operand.vmem [shape: f32[32,8], index: 0, kind: input, shape index: {}]
  %s1 = inlined_call_operand.vmem [shape: f32[8,8], index: 1, kind: input, shape index: {}]
  %s2 = inlined_call_operand.vmem [shape: f32[1,8], index: 2, kind: input, shape index: {}]
  %s3 = inlined_call_operand.vmem [shape: f32[32,8], index: 3, kind: output, shape index: {}]
  %s4 = sld [smem:[#allocation0]]
  $region22: #{_lambda_.13} parent=0
    _
  %s6 = ssub.s32 1, %s4
  %s7 = scalar_select 0, %s6, %s4
  // Predicated region
  $region2: #{_lambda_.13} parent=0 // pred_check
    _
  $region3: #{_lambda_.13} parent=0 // pred_check_branch
    %9 = sbr.rel (0) target = $region5
  $region4: #{_lambda_.13} parent=0 // pred_region
    _
  $region5: #{_lambda_.13} parent=0 // pred_fallthru
    _
  // Predicated region
  $region6: #{_lambda_.13} parent=0 // pred_check
    _
  $region7: #{_lambda_.13} parent=0 // pred_check_branch
    %11 = sbr.rel (0) target = $region9
  $region8: #{_lambda_.13} parent=0 // pred_region
    _
  $region9: #{_lambda_.13} parent=0 // pred_fallthru
    _
  // Predicated region
  $region10: #{_lambda_.13} parent=0 // pred_check
    _
  $region11: #{_lambda_.13} parent=0 // pred_check_branch
    %13 = sbr.rel (0) target = $region13
  $region12: #{_lambda_.13} parent=0 // pred_region
    _
  $region13: #{_lambda_.13} parent=0 // pred_fallthru
    _
  %v14 = vld [vmem:[%s0] sm:$0xff]
  %v15 = vld [vmem:[%s0 + $0x8] sm:$0xff]
  %v16 = vld [vmem:[%s0 + $0x10] sm:$0xff]
  %v17 = vld [vmem:[%s0 + $0x18] sm:$0xff]
  %v18 = vld [vmem:[%s1] sm:$0xff]
  %v19 = vld [vmem:[%s2] sm:$0x1]
  %v21 = vlaneseq
  %v22 = vshrl.u32 %v21, 7
  %v23 = vsub.s32 0, %v22
  %v24 = vrot.slane %v19, %v23
  %vm26 = vcmask 64512
  %v28 = vsel %vm26, %v14, 0
  %v31 = vsel %vm26, %v15, 0
  %v34 = vsel %vm26, %v16, 0
  %v37 = vsel %vm26, %v17, 0
  %39 = vmatprep.subr.mxu0 0.0
  %40 = vmatpush1.msra.mxu0 %v18
  %41 = vmatprep.subr.mxu0 0.0
  %42 = vmatpush1.msra.mxu0 0.0
  %43 = vmatprep.subr.mxu0 0.0
  %44 = vmatpush1.msra.mxu0 0.0
  %45 = vmatprep.subr.mxu0 0.0
  %46 = vmatpush1.msra.mxu0 0.0
  %47 = vmatprep.subr.mxu0 0.0
  %48 = vmatpush1.msra.mxu0 0.0
  %49 = vmatprep.subr.mxu0 0.0
  %50 = vmatpush1.msra.mxu0 0.0
  %51 = vmatprep.subr.mxu0 0.0
  %52 = vmatpush1.msra.mxu0 0.0
  %53 = vmatprep.subr.mxu0 0.0
  %54 = vmatpush1.msra.mxu0 0.0
  %55 = vmatprep.subr.mxu0 0.0
  %56 = vmatpush1.msra.mxu0 0.0
  %57 = vmatprep.subr.mxu0 0.0
  %58 = vmatpush1.msra.mxu0 0.0
  %59 = vmatprep.subr.mxu0 0.0
  %60 = vmatpush1.msra.mxu0 0.0
  %61 = vmatprep.subr.mxu0 0.0
  %62 = vmatpush1.msra.mxu0 0.0
  %63 = vmatprep.subr.mxu0 0.0
  %64 = vmatpush1.msra.mxu0 0.0
  %65 = vmatprep.subr.mxu0 0.0
  %66 = vmatpush1.msra.mxu0 0.0
  %67 = vmatprep.subr.mxu0 0.0
  %68 = vmatpush1.msra.mxu0 0.0
  %69 = vmatprep.subr.mxu0 0.0
  %70 = vmatpush1.msra.mxu0 0.0
  %71 = vmatprep.subr.mxu0 0.0
  %72 = vmatpush1.msra.mxu0 0.0
  %73 = vmatprep.subr.mxu0 0.0
  %74 = vmatpush1.msra.mxu0 0.0
  %75 = vmatprep.subr.mxu0 0.0
  %76 = vmatpush1.msra.mxu0 0.0
  %77 = vmatprep.subr.mxu0 0.0
  %78 = vmatpush1.msra.mxu0 0.0
  %79 = vmatprep.subr.mxu0 0.0
  %80 = vmatpush1.msra.mxu0 0.0
  %81 = vmatprep.subr.mxu0 0.0
  %82 = vmatpush1.msra.mxu0 0.0
  %83 = vmatprep.subr.mxu0 0.0
  %84 = vmatpush1.msra.mxu0 0.0
  %85 = vmatprep.subr.mxu0 0.0
  %86 = vmatpush1.msra.mxu0 0.0
  %87 = vmatprep.subr.mxu0 0.0
  %88 = vmatpush1.msra.mxu0 0.0
  %89 = vmatprep.subr.mxu0 0.0
  %90 = vmatpush1.msra.mxu0 0.0
  %91 = vmatprep.subr.mxu0 0.0
  %92 = vmatpush1.msra.mxu0 0.0
  %93 = vmatprep.subr.mxu0 0.0
  %94 = vmatpush1.msra.mxu0 0.0
  %95 = vmatprep.subr.mxu0 0.0
  %96 = vmatpush1.msra.mxu0 0.0
  %97 = vmatprep.subr.mxu0 0.0
  %98 = vmatpush1.msra.mxu0 0.0
  %99 = vmatprep.subr.mxu0 0.0
  %100 = vmatpush1.msra.mxu0 0.0
  %101 = vmatprep.subr.mxu0 0.0
  %102 = vmatpush1.msra.mxu0 0.0
  %103 = vmatprep.mubr.f32.mxu0 0.0
  %104 = vmatmul.mubr.f32.gmra.mrb[0].mxu0 %v28
  %v105 = vpop.f32.mrb[0].mxu0
  %v106 = vadd.f32 %v24, %v105
  %v107 = vpop.f32.mrb[0].mxu0
  %108 = vmatprep.mubr.f32.mxu0 0.0
  %109 = vmatmul.mubr.f32.gmra.mrb[0].mxu0 %v31
  %v110 = vpop.f32.mrb[0].mxu0
  %v111 = vadd.f32 %v24, %v110
  %v112 = vpop.f32.mrb[0].mxu0
  %113 = vmatprep.mubr.f32.mxu0 0.0
  %114 = vmatmul.mubr.f32.gmra.mrb[0].mxu0 %v34
  %v115 = vpop.f32.mrb[0].mxu0
  %v116 = vadd.f32 %v24, %v115
  %v117 = vpop.f32.mrb[0].mxu0
  %118 = vmatprep.mubr.f32.mxu0 0.0
  %119 = vmatmul.mubr.f32.gmra.mrb[0].mxu0 %v37
  %v120 = vpop.f32.mrb[0].mxu0
  %v121 = vadd.f32 %v24, %v120
  %v122 = vpop.f32.mrb[0].mxu0
  %123 = vdwg.mxu0
  %124 = vst.msk [vmem:[%s3] sm:$0xff] %vm26, %v106
  %125 = vst.msk [vmem:[%s3 + $0x8] sm:$0xff] %vm26, %v111
  %126 = vst.msk [vmem:[%s3 + $0x10] sm:$0xff] %vm26, %v116
  %127 = vst.msk [vmem:[%s3 + $0x18] sm:$0xff] %vm26, %v121
  // Predicated region
  $region14: #{_lambda_.13} parent=0 // pred_check
    _
  $region15: #{_lambda_.13} parent=0 // pred_check_branch
    %129 = sbr.rel (0) target = $region17
  $region16: #{_lambda_.13} parent=0 // pred_region
    _
  $region17: #{_lambda_.13} parent=0 // pred_fallthru
    _
  // Predicated region
  $region18: #{_lambda_.13} parent=0 // pred_check
    _
  $region19: #{_lambda_.13} parent=0 // pred_check_branch
    %131 = sbr.rel (0) target = $region21
  $region20: #{_lambda_.13} parent=0 // pred_region
    _
  $region21: #{_lambda_.13} parent=0 // pred_fallthru
    _

// kernel: _lambda_.21
$region0: #{_lambda_.21}
  #allocation0 [shape = 'u32[]', space=smem, size = 0x4, offset = 0x4, fixed_abs, tag = 'smem constant byte address 0x4 - core index']
  #allocation1 [shape = 'u32[144,128]{1,0:T(1,128)}', space=vmem, size = 0x12000, scoped, tag = 'internal scratch']
  %s0 = inlined_call_operand.vmem [shape: f32[3,2,64], index: 0, kind: input, shape index: {}]
  %s1 = inlined_call_operand.vmem [shape: f32[3,64,64], index: 1, kind: input, shape index: {}]
  %s2 = inlined_call_operand.vmem [shape: f32[3,2,64], index: 2, kind: output, shape index: {}]
  %s3 = sld [smem:[#allocation0]]
  $region41: #{_lambda_.21} parent=0
    _
  %s5 = ssub.s32 1, %s3
  %s6 = scalar_select 0, %s5, %s3
  loop: start=0, step=1, limit=5
  $region2: #{_lambda_.21} parent=0 // loop_pre_header
    _
  $region3: #{_lambda_.21} parent=0 // loop_header
    %s8 = sphi 0, %s12
    %p9 = scmp.ge.s32.totalorder %s8, 5
    %s18 = sphi 0, %s20
    %s21 = sphi 0, %s18
    %s22 = sphi 0, %s21
    %s38 = sphi 0, %s22
    %s44 = sphi 0, %s46
    %s47 = sphi 0, %s44
    %s48 = sphi 0, %s47
    %s64 = sphi 0, %s48
    %s70 = sphi 0, %s72
    %s73 = sphi 0, %s70
    %s74 = sphi 0, %s73
    %s90 = sphi 0, %s74
  $region4: #{_lambda_.21} parent=0 // loop_header_branch
    %11 = sbr.rel (%p9) target = $region8
  $region5: #{_lambda_.21} parent=0 // loop_body
    %s13 = ssub.s32 %s8, 1
    %s14 = ssub.s32 %s8, 2
    %s15 = sadd.s32 %s8, 1
    %s16 = ssub.s32 %s8, %s15
    %p17 = scmp.eq.s32.totalorder %s16, 0
    %s19 = sadd.s32 %s18, 1
    %s20 = scalar_select %p17, %s18, %s19
    %p23 = pneg %p17
    %p24 = scmp.eq.s32.totalorder %s8, 2
    %p25 = por %p23, %p24
    %p26 = scmp.ne.s32.totalorder %s18, %s21
    %p27 = scmp.eq.s32.totalorder %s8, 0
    %p28 = por %p26, %p27
    %p29 = scmp.ne.s32.totalorder %s18, %s21
    %p30 = scmp.eq.s32.totalorder %s13, 2
    %p31 = por %p29, %p30
    %p32 = scmp.ne.s32.totalorder %s21, %s22
    %p33 = scmp.eq.s32.totalorder %s13, 0
    %p34 = por %p32, %p33
    %p35 = scmp.ne.s32.totalorder %s21, %s22
    %p36 = scmp.eq.s32.totalorder %s14, 2
    %p37 = por %p35, %p36
    %p39 = scmp.ne.s32.totalorder %s22, %s38
    %p40 = scmp.eq.s32.totalorder %s14, 0
    %p41 = por %p39, %p40
    %s42 = ssub.s32 %s8, %s15
    %p43 = scmp.eq.s32.totalorder %s42, 0
    %s45 = sadd.s32 %s44, 1
    %s46 = scalar_select %p43, %s44, %s45
    %p49 = pneg %p43
    %p50 = scmp.eq.s32.totalorder %s8, 2
    %p51 = por %p49, %p50
    %p52 = scmp.ne.s32.totalorder %s44, %s47
    %p53 = scmp.eq.s32.totalorder %s8, 0
    %p54 = por %p52, %p53
    %p55 = scmp.ne.s32.totalorder %s44, %s47
    %p56 = scmp.eq.s32.totalorder %s13, 2
    %p57 = por %p55, %p56
    %p58 = scmp.ne.s32.totalorder %s47, %s48
    %p59 = scmp.eq.s32.totalorder %s13, 0
    %p60 = por %p58, %p59
    %p61 = scmp.ne.s32.totalorder %s47, %s48
    %p62 = scmp.eq.s32.totalorder %s14, 2
    %p63 = por %p61, %p62
    %p65 = scmp.ne.s32.totalorder %s48, %s64
    %p66 = scmp.eq.s32.totalorder %s14, 0
    %p67 = por %p65, %p66
    %s68 = ssub.s32 %s8, %s15
    %p69 = scmp.eq.s32.totalorder %s68, 0
    %s71 = sadd.s32 %s70, 1
    %s72 = scalar_select %p69, %s70, %s71
    %p75 = pneg %p69
    %p76 = scmp.eq.s32.totalorder %s8, 2
    %p77 = por %p75, %p76
    %p78 = scmp.ne.s32.totalorder %s70, %s73
    %p79 = scmp.eq.s32.totalorder %s8, 0
    %p80 = por %p78, %p79
    %p81 = scmp.ne.s32.totalorder %s70, %s73
    %p82 = scmp.eq.s32.totalorder %s13, 2
    %p83 = por %p81, %p82
    %p84 = scmp.ne.s32.totalorder %s73, %s74
    %p85 = scmp.eq.s32.totalorder %s13, 0
    %p86 = por %p84, %p85
    %p87 = scmp.ne.s32.totalorder %s73, %s74
    %p88 = scmp.eq.s32.totalorder %s14, 2
    %p89 = por %p87, %p88
    %p91 = scmp.ne.s32.totalorder %s74, %s90
    %p92 = scmp.eq.s32.totalorder %s14, 0
    %p93 = por %p91, %p92
    %p94 = scmp.le.s32.totalorder 1, %s8
    %p95 = scmp.lt.s32.totalorder %s8, 4
    %p96 = pnand %p94, %p95
    %p97 = pneg %p96
    // Predicated region
    $region9: #{_lambda_.21} parent=5 // pred_check
      _
    $region10: #{_lambda_.21} parent=5 // pred_check_branch
      %99 = sbr.rel (%p96) target = $region12
    $region11: #{_lambda_.21} parent=5 // pred_region
      %s100 = ssub.s32 %s8, 1
    $region12: #{_lambda_.21} parent=5 // pred_fallthru
      _
    %p101 = scmp.lt.s32.totalorder %s8, 3
    // Predicated region
    $region13: #{_lambda_.21} parent=5 // pred_check
      %p102 = pneg %p101
    $region14: #{_lambda_.21} parent=5 // pred_check_branch
      %104 = sbr.rel (%p102) target = $region16
    $region15: #{_lambda_.21} parent=5 // pred_region
      // Predicated region
      $region17: #{_lambda_.21} parent=15 // pred_check
        %p105 = pneg %p28
      $region18: #{_lambda_.21} parent=15 // pred_check_branch
        %107 = sbr.rel (%p105) target = $region20
      $region19: #{_lambda_.21} parent=15 // pred_region
        %p108 = scmp.lt.s32.totalorder %s8, 2
        %s109 = scalar_select %p108, %s8, 2
        %s110 = smul.addr %s109, 2
        %s111 = scalar_lea.vmem %s0, %s110
      $region20: #{_lambda_.21} parent=15 // pred_fallthru
        _
      // Predicated region
      $region21: #{_lambda_.21} parent=15 // pred_check
        %p112 = pneg %p54
      $region22: #{_lambda_.21} parent=15 // pred_check_branch
        %114 = sbr.rel (%p112) target = $region24
      $region23: #{_lambda_.21} parent=15 // pred_region
        %p115 = scmp.lt.s32.totalorder %s8, 2
        %s116 = scalar_select %p115, %s8, 2
        %s117 = smul.addr %s116, 8
        %s118 = smul.addr %s117, 8
        %s119 = scalar_lea.vmem %s1, %s118
      $region24: #{_lambda_.21} parent=15 // pred_fallthru
        _
    $region16: #{_lambda_.21} parent=5 // pred_fallthru
      _
    %p120 = scmp.le.s32.totalorder 1, %s8
    %p121 = scmp.lt.s32.totalorder %s8, 4
    %p122 = pnand %p120, %p121
    %p123 = pneg %p122
    // Predicated region
    $region25: #{_lambda_.21} parent=5 // pred_check
      _
    $region26: #{_lambda_.21} parent=5 // pred_check_branch
      %125 = sbr.rel (%p122) target = $region28
    $region27: #{_lambda_.21} parent=5 // pred_region
      %s126 = ssub.s32 %s8, 1
      %p127 = scmp.lt.s32.totalorder %s13, 2
      %s128 = scalar_select %p127, %s13, 2
      %s129 = smul.addr %s128, 2
      %s130 = scalar_lea.vmem %s0, %s129
      %p131 = pneg %p34
      %p132 = pneg %p31
      %p133 = scmp.lt.s32.totalorder %s13, 2
      %s134 = scalar_select %p133, %s13, 2
      %s135 = smul.addr %s134, 8
      %s136 = smul.addr %s135, 8
      %s137 = scalar_lea.vmem %s1, %s136
      %p138 = pneg %p60
      %p139 = pneg %p57
      %p140 = pneg %p86
      %p141 = pneg %p83
      %p142 = scmp.lt.s32.totalorder %s13, 2
      %s143 = scalar_select %p142, %s13, 2
      %s144 = smul.addr %s143, 2
      %s145 = scalar_lea.vmem %s2, %s144
      %p146 = scmp.lt.s32.totalorder %s13, 2
      %s147 = scalar_select %p146, %s13, 2
      %s148 = smul.addr %s147, 2
      %s149 = scalar_lea.vmem %s0, %s148
      %p150 = scmp.lt.s32.totalorder %s13, 2
      %s151 = scalar_select %p150, %s13, 2
      %s152 = smul.addr %s151, 8
      %s153 = smul.addr %s152, 8
      %s154 = scalar_lea.vmem %s1, %s153
      %p155 = scmp.lt.s32.totalorder %s13, 2
      %s156 = scalar_select %p155, %s13, 2
      %s157 = smul.addr %s156, 2
      %s158 = scalar_lea.vmem %s2, %s157
      %v159 = vld [vmem:[%s149] sm:$0x3]
      %v160 = vld [vmem:[%s154] sm:$0xff]
      %v161 = vld [vmem:[%s154 + $0x8] sm:$0xff]
      %v162 = vld [vmem:[%s154 + $0x10] sm:$0xff]
      %v163 = vld [vmem:[%s154 + $0x18] sm:$0xff]
      %v164 = vld [vmem:[%s154 + $0x20] sm:$0xff]
      %v165 = vld [vmem:[%s154 + $0x28] sm:$0xff]
      %v166 = vld [vmem:[%s154 + $0x30] sm:$0xff]
      %v167 = vld [vmem:[%s154 + $0x38] sm:$0xff]
      %vm168 = vcmask 523264
      %v170 = vsel %vm168, %v159, 0
      %172 = vmatprep.subr.mxu0 0.0
      %173 = vmatpush1.msra.mxu0 %v160
      %174 = vmatprep.subr.mxu0 0.0
      %175 = vmatpush1.msra.mxu0 %v161
      %176 = vmatprep.subr.mxu0 0.0
      %177 = vmatpush1.msra.mxu0 %v162
      %178 = vmatprep.subr.mxu0 0.0
      %179 = vmatpush1.msra.mxu0 %v163
      %180 = vmatprep.subr.mxu0 0.0
      %181 = vmatpush1.msra.mxu0 %v164
      %182 = vmatprep.subr.mxu0 0.0
      %183 = vmatpush1.msra.mxu0 %v165
      %184 = vmatprep.subr.mxu0 0.0
      %185 = vmatpush1.msra.mxu0 %v166
      %186 = vmatprep.subr.mxu0 0.0
      %187 = vmatpush1.msra.mxu0 %v167
      %188 = vmatprep.subr.mxu0 0.0
      %189 = vmatpush1.msra.mxu0 0.0
      %190 = vmatprep.subr.mxu0 0.0
      %191 = vmatpush1.msra.mxu0 0.0
      %192 = vmatprep.subr.mxu0 0.0
      %193 = vmatpush1.msra.mxu0 0.0
      %194 = vmatprep.subr.mxu0 0.0
      %195 = vmatpush1.msra.mxu0 0.0
      %196 = vmatprep.subr.mxu0 0.0
      %197 = vmatpush1.msra.mxu0 0.0
      %198 = vmatprep.subr.mxu0 0.0
      %199 = vmatpush1.msra.mxu0 0.0
      %200 = vmatprep.subr.mxu0 0.0
      %201 = vmatpush1.msra.mxu0 0.0
      %202 = vmatprep.subr.mxu0 0.0
      %203 = vmatpush1.msra.mxu0 0.0
      %204 = vmatprep.subr.mxu0 0.0
      %205 = vmatpush1.msra.mxu0 0.0
      %206 = vmatprep.subr.mxu0 0.0
      %207 = vmatpush1.msra.mxu0 0.0
      %208 = vmatprep.subr.mxu0 0.0
      %209 = vmatpush1.msra.mxu0 0.0
      %210 = vmatprep.subr.mxu0 0.0
      %211 = vmatpush1.msra.mxu0 0.0
      %212 = vmatprep.subr.mxu0 0.0
      %213 = vmatpush1.msra.mxu0 0.0
      %214 = vmatprep.subr.mxu0 0.0
      %215 = vmatpush1.msra.mxu0 0.0
      %216 = vmatprep.subr.mxu0 0.0
      %217 = vmatpush1.msra.mxu0 0.0
      %218 = vmatprep.subr.mxu0 0.0
      %219 = vmatpush1.msra.mxu0 0.0
      %220 = vmatprep.subr.mxu0 0.0
      %221 = vmatpush1.msra.mxu0 0.0
      %222 = vmatprep.subr.mxu0 0.0
      %223 = vmatpush1.msra.mxu0 0.0
      %224 = vmatprep.subr.mxu0 0.0
      %225 = vmatpush1.msra.mxu0 0.0
      %226 = vmatprep.subr.mxu0 0.0
      %227 = vmatpush1.msra.mxu0 0.0
      %228 = vmatprep.subr.mxu0 0.0
      %229 = vmatpush1.msra.mxu0 0.0
      %230 = vmatprep.subr.mxu0 0.0
      %231 = vmatpush1.msra.mxu0 0.0
      %232 = vmatprep.subr.mxu0 0.0
      %233 = vmatpush1.msra.mxu0 0.0
      %234 = vmatprep.subr.mxu0 0.0
      %235 = vmatpush1.msra.mxu0 0.0
      %236 = vmatprep.mubr.f32.mxu0 0.0
      %237 = vmatmul.mubr.f32.gmra.mrb[0].mxu0 %v170
      %v238 = vpop.f32.mrb[0].mxu0
      %v239 = vadd.f32 0.0, %v238
      %v240 = vpop.f32.mrb[0].mxu0
      %241 = vdwg.mxu0
      %vm242 = vcmask 517120
      %243 = vst.msk [vmem:[%s158] sm:$0x3] %vm242, %v239
      %p244 = scmp.lt.s32.totalorder %s13, 2
      %s245 = scalar_select %p244, %s13, 2
      %s246 = smul.addr %s245, 2
      %s247 = scalar_lea.vmem %s2, %s246
      // Predicated region
      $region29: #{_lambda_.21} parent=27 // pred_check
        %p248 = pneg %p83
      $region30: #{_lambda_.21} parent=27 // pred_check_branch
        %250 = sbr.rel (%p248) target = $region32
      $region31: #{_lambda_.21} parent=27 // pred_region
        _
      $region32: #{_lambda_.21} parent=27 // pred_fallthru
        _
    $region28: #{_lambda_.21} parent=5 // pred_fallthru
      _
    %p251 = scmp.le.s32.totalorder 2, %s8
    // Predicated region
    $region33: #{_lambda_.21} parent=5 // pred_check
      %p252 = pneg %p251
    $region34: #{_lambda_.21} parent=5 // pred_check_branch
      %254 = sbr.rel (%p252) target = $region36
    $region35: #{_lambda_.21} parent=5 // pred_region
      %s255 = ssub.s32 %s8, 2
      // Predicated region
      $region37: #{_lambda_.21} parent=35 // pred_check
        %p256 = pneg %p89
      $region38: #{_lambda_.21} parent=35 // pred_check_branch
        %258 = sbr.rel (%p256) target = $region40
      $region39: #{_lambda_.21} parent=35 // pred_region
        %p259 = scmp.lt.s32.totalorder %s14, 2
        %s260 = scalar_select %p259, %s14, 2
        %s261 = smul.addr %s260, 2
        %s262 = scalar_lea.vmem %s2, %s261
      $region40: #{_lambda_.21} parent=35 // pred_fallthru
        _
    $region36: #{_lambda_.21} parent=5 // pred_fallthru
      _
  $region6: #{_lambda_.21} parent=0 // loop_footer
    %s12 = sadd.s32 1, %s8
  $region7: #{_lambda_.21} parent=0 // loop_footer_branch
    %7 = sbr.rel target = $region3
  $region8: #{_lambda_.21} parent=0 // loop_exit
    _

// kernel: _lambda_.14
$region0: #{_lambda_.14}
  #allocation0 [shape = 'u32[]', space=smem, size = 0x4, offset = 0x4, fixed_abs, tag = 'smem constant byte address 0x4 - core index']
  #allocation1 [shape = 'u32[144,128]{1,0:T(1,128)}', space=vmem, size = 0x12000, scoped, tag = 'internal scratch']
  %s0 = inlined_call_operand.vmem [shape: f32[16,8], index: 0, kind: input, shape index: {}]
  %s1 = inlined_call_operand.vmem [shape: f32[8,8], index: 1, kind: input, shape index: {}]
  %s2 = inlined_call_operand.vmem [shape: f32[1,8], index: 2, kind: input, shape index: {}]
  %s3 = inlined_call_operand.vmem [shape: f32[16,8], index: 3, kind: output, shape index: {}]
  %s4 = sld [smem:[#allocation0]]
  $region22: #{_lambda_.14} parent=0
    _
  %s6 = ssub.s32 1, %s4
  %s7 = scalar_select 0, %s6, %s4
  // Predicated region
  $region2: #{_lambda_.14} parent=0 // pred_check
    _
  $region3: #{_lambda_.14} parent=0 // pred_check_branch
    %9 = sbr.rel (0) target = $region5
  $region4: #{_lambda_.14} parent=0 // pred_region
    _
  $region5: #{_lambda_.14} parent=0 // pred_fallthru
    _
  // Predicated region
  $region6: #{_lambda_.14} parent=0 // pred_check
    _
  $region7: #{_lambda_.14} parent=0 // pred_check_branch
    %11 = sbr.rel (0) target = $region9
  $region8: #{_lambda_.14} parent=0 // pred_region
    _
  $region9: #{_lambda_.14} parent=0 // pred_fallthru
    _
  // Predicated region
  $region10: #{_lambda_.14} parent=0 // pred_check
    _
  $region11: #{_lambda_.14} parent=0 // pred_check_branch
    %13 = sbr.rel (0) target = $region13
  $region12: #{_lambda_.14} parent=0 // pred_region
    _
  $region13: #{_lambda_.14} parent=0 // pred_fallthru
    _
  %v14 = vld [vmem:[%s0] sm:$0xff]
  %v15 = vld [vmem:[%s0 + $0x8] sm:$0xff]
  %v16 = vld [vmem:[%s1] sm:$0xff]
  %v17 = vld [vmem:[%s2] sm:$0x1]
  %v19 = vlaneseq
  %v20 = vshrl.u32 %v19, 7
  %v21 = vsub.s32 0, %v20
  %v22 = vrot.slane %v17, %v21
  %vm24 = vcmask 64512
  %v26 = vsel %vm24, %v14, 0
  %v29 = vsel %vm24, %v15, 0
  %31 = vmatprep.subr.mxu0 0.0
  %32 = vmatpush1.msra.mxu0 %v16
  %33 = vmatprep.subr.mxu0 0.0
  %34 = vmatpush1.msra.mxu0 0.0
  %35 = vmatprep.subr.mxu0 0.0
  %36 = vmatpush1.msra.mxu0 0.0
  %37 = vmatprep.subr.mxu0 0.0
  %38 = vmatpush1.msra.mxu0 0.0
  %39 = vmatprep.subr.mxu0 0.0
  %40 = vmatpush1.msra.mxu0 0.0
  %41 = vmatprep.subr.mxu0 0.0
  %42 = vmatpush1.msra.mxu0 0.0
  %43 = vmatprep.subr.mxu0 0.0
  %44 = vmatpush1.msra.mxu0 0.0
  %45 = vmatprep.subr.mxu0 0.0
  %46 = vmatpush1.msra.mxu0 0.0
  %47 = vmatprep.subr.mxu0 0.0
  %48 = vmatpush1.msra.mxu0 0.0
  %49 = vmatprep.subr.mxu0 0.0
  %50 = vmatpush1.msra.mxu0 0.0
  %51 = vmatprep.subr.mxu0 0.0
  %52 = vmatpush1.msra.mxu0 0.0
  %53 = vmatprep.subr.mxu0 0.0
  %54 = vmatpush1.msra.mxu0 0.0
  %55 = vmatprep.subr.mxu0 0.0
  %56 = vmatpush1.msra.mxu0 0.0
  %57 = vmatprep.subr.mxu0 0.0
  %58 = vmatpush1.msra.mxu0 0.0
  %59 = vmatprep.subr.mxu0 0.0
  %60 = vmatpush1.msra.mxu0 0.0
  %61 = vmatprep.subr.mxu0 0.0
  %62 = vmatpush1.msra.mxu0 0.0
  %63 = vmatprep.subr.mxu0 0.0
  %64 = vmatpush1.msra.mxu0 0.0
  %65 = vmatprep.subr.mxu0 0.0
  %66 = vmatpush1.msra.mxu0 0.0
  %67 = vmatprep.subr.mxu0 0.0
  %68 = vmatpush1.msra.mxu0 0.0
  %69 = vmatprep.subr.mxu0 0.0
  %70 = vmatpush1.msra.mxu0 0.0
  %71 = vmatprep.subr.mxu0 0.0
  %72 = vmatpush1.msra.mxu0 0.0
  %73 = vmatprep.subr.mxu0 0.0
  %74 = vmatpush1.msra.mxu0 0.0
  %75 = vmatprep.subr.mxu0 0.0
  %76 = vmatpush1.msra.mxu0 0.0
  %77 = vmatprep.subr.mxu0 0.0
  %78 = vmatpush1.msra.mxu0 0.0
  %79 = vmatprep.subr.mxu0 0.0
  %80 = vmatpush1.msra.mxu0 0.0
  %81 = vmatprep.subr.mxu0 0.0
  %82 = vmatpush1.msra.mxu0 0.0
  %83 = vmatprep.subr.mxu0 0.0
  %84 = vmatpush1.msra.mxu0 0.0
  %85 = vmatprep.subr.mxu0 0.0
  %86 = vmatpush1.msra.mxu0 0.0
  %87 = vmatprep.subr.mxu0 0.0
  %88 = vmatpush1.msra.mxu0 0.0
  %89 = vmatprep.subr.mxu0 0.0
  %90 = vmatpush1.msra.mxu0 0.0
  %91 = vmatprep.subr.mxu0 0.0
  %92 = vmatpush1.msra.mxu0 0.0
  %93 = vmatprep.subr.mxu0 0.0
  %94 = vmatpush1.msra.mxu0 0.0
  %95 = vmatprep.mubr.f32.mxu0 0.0
  %96 = vmatmul.mubr.f32.gmra.mrb[0].mxu0 %v26
  %v97 = vpop.f32.mrb[0].mxu0
  %v98 = vadd.f32 %v22, %v97
  %v99 = vpop.f32.mrb[0].mxu0
  %100 = vmatprep.mubr.f32.mxu0 0.0
  %101 = vmatmul.mubr.f32.gmra.mrb[0].mxu0 %v29
  %v102 = vpop.f32.mrb[0].mxu0
  %v103 = vadd.f32 %v22, %v102
  %v104 = vpop.f32.mrb[0].mxu0
  %105 = vdwg.mxu0
  %106 = vst.msk [vmem:[%s3] sm:$0xff] %vm24, %v98
  %107 = vst.msk [vmem:[%s3 + $0x8] sm:$0xff] %vm24, %v103
  // Predicated region
  $region14: #{_lambda_.14} parent=0 // pred_check
    _
  $region15: #{_lambda_.14} parent=0 // pred_check_branch
    %109 = sbr.rel (0) target = $region17
  $region16: #{_lambda_.14} parent=0 // pred_region
    _
  $region17: #{_lambda_.14} parent=0 // pred_fallthru
    _
  // Predicated region
  $region18: #{_lambda_.14} parent=0 // pred_check
    _
  $region19: #{_lambda_.14} parent=0 // pred_check_branch
    %111 = sbr.rel (0) target = $region21
  $region20: #{_lambda_.14} parent=0 // pred_region
    _
  $region21: #{_lambda_.14} parent=0 // pred_fallthru
    _

// kernel: _lambda_.19
$region0: #{_lambda_.19}
  #allocation0 [shape = 'u32[]', space=smem, size = 0x4, offset = 0x4, fixed_abs, tag = 'smem constant byte address 0x4 - core index']
  #allocation1 [shape = 'u32[144,128]{1,0:T(1,128)}', space=vmem, size = 0x12000, scoped, tag = 'internal scratch']
  %s0 = inlined_call_operand.vmem [shape: f32[2,2,64], index: 0, kind: input, shape index: {}]
  %s1 = inlined_call_operand.vmem [shape: f32[2,64,64], index: 1, kind: input, shape index: {}]
  %s2 = inlined_call_operand.vmem [shape: f32[2,2,64], index: 2, kind: output, shape index: {}]
  %s3 = sld [smem:[#allocation0]]
  $region41: #{_lambda_.19} parent=0
    _
  %s5 = ssub.s32 1, %s3
  %s6 = scalar_select 0, %s5, %s3
  loop: start=0, step=1, limit=4
  $region2: #{_lambda_.19} parent=0 // loop_pre_header
    _
  $region3: #{_lambda_.19} parent=0 // loop_header
    %s8 = sphi 0, %s12
    %p9 = scmp.ge.s32.totalorder %s8, 4
    %s18 = sphi 0, %s20
    %s21 = sphi 0, %s18
    %s22 = sphi 0, %s21
    %s38 = sphi 0, %s22
    %s44 = sphi 0, %s46
    %s47 = sphi 0, %s44
    %s48 = sphi 0, %s47
    %s64 = sphi 0, %s48
    %s70 = sphi 0, %s72
    %s73 = sphi 0, %s70
    %s74 = sphi 0, %s73
    %s90 = sphi 0, %s74
  $region4: #{_lambda_.19} parent=0 // loop_header_branch
    %11 = sbr.rel (%p9) target = $region8
  $region5: #{_lambda_.19} parent=0 // loop_body
    %s13 = ssub.s32 %s8, 1
    %s14 = ssub.s32 %s8, 2
    %s15 = sadd.s32 %s8, 1
    %s16 = ssub.s32 %s8, %s15
    %p17 = scmp.eq.s32.totalorder %s16, 0
    %s19 = sadd.s32 %s18, 1
    %s20 = scalar_select %p17, %s18, %s19
    %p23 = pneg %p17
    %p24 = scmp.eq.s32.totalorder %s8, 1
    %p25 = por %p23, %p24
    %p26 = scmp.ne.s32.totalorder %s18, %s21
    %p27 = scmp.eq.s32.totalorder %s8, 0
    %p28 = por %p26, %p27
    %p29 = scmp.ne.s32.totalorder %s18, %s21
    %p30 = scmp.eq.s32.totalorder %s13, 1
    %p31 = por %p29, %p30
    %p32 = scmp.ne.s32.totalorder %s21, %s22
    %p33 = scmp.eq.s32.totalorder %s13, 0
    %p34 = por %p32, %p33
    %p35 = scmp.ne.s32.totalorder %s21, %s22
    %p36 = scmp.eq.s32.totalorder %s14, 1
    %p37 = por %p35, %p36
    %p39 = scmp.ne.s32.totalorder %s22, %s38
    %p40 = scmp.eq.s32.totalorder %s14, 0
    %p41 = por %p39, %p40
    %s42 = ssub.s32 %s8, %s15
    %p43 = scmp.eq.s32.totalorder %s42, 0
    %s45 = sadd.s32 %s44, 1
    %s46 = scalar_select %p43, %s44, %s45
    %p49 = pneg %p43
    %p50 = scmp.eq.s32.totalorder %s8, 1
    %p51 = por %p49, %p50
    %p52 = scmp.ne.s32.totalorder %s44, %s47
    %p53 = scmp.eq.s32.totalorder %s8, 0
    %p54 = por %p52, %p53
    %p55 = scmp.ne.s32.totalorder %s44, %s47
    %p56 = scmp.eq.s32.totalorder %s13, 1
    %p57 = por %p55, %p56
    %p58 = scmp.ne.s32.totalorder %s47, %s48
    %p59 = scmp.eq.s32.totalorder %s13, 0
    %p60 = por %p58, %p59
    %p61 = scmp.ne.s32.totalorder %s47, %s48
    %p62 = scmp.eq.s32.totalorder %s14, 1
    %p63 = por %p61, %p62
    %p65 = scmp.ne.s32.totalorder %s48, %s64
    %p66 = scmp.eq.s32.totalorder %s14, 0
    %p67 = por %p65, %p66
    %s68 = ssub.s32 %s8, %s15
    %p69 = scmp.eq.s32.totalorder %s68, 0
    %s71 = sadd.s32 %s70, 1
    %s72 = scalar_select %p69, %s70, %s71
    %p75 = pneg %p69
    %p76 = scmp.eq.s32.totalorder %s8, 1
    %p77 = por %p75, %p76
    %p78 = scmp.ne.s32.totalorder %s70, %s73
    %p79 = scmp.eq.s32.totalorder %s8, 0
    %p80 = por %p78, %p79
    %p81 = scmp.ne.s32.totalorder %s70, %s73
    %p82 = scmp.eq.s32.totalorder %s13, 1
    %p83 = por %p81, %p82
    %p84 = scmp.ne.s32.totalorder %s73, %s74
    %p85 = scmp.eq.s32.totalorder %s13, 0
    %p86 = por %p84, %p85
    %p87 = scmp.ne.s32.totalorder %s73, %s74
    %p88 = scmp.eq.s32.totalorder %s14, 1
    %p89 = por %p87, %p88
    %p91 = scmp.ne.s32.totalorder %s74, %s90
    %p92 = scmp.eq.s32.totalorder %s14, 0
    %p93 = por %p91, %p92
    %p94 = scmp.le.s32.totalorder 1, %s8
    %p95 = scmp.lt.s32.totalorder %s8, 3
    %p96 = pnand %p94, %p95
    %p97 = pneg %p96
    // Predicated region
    $region9: #{_lambda_.19} parent=5 // pred_check
      _
    $region10: #{_lambda_.19} parent=5 // pred_check_branch
      %99 = sbr.rel (%p96) target = $region12
    $region11: #{_lambda_.19} parent=5 // pred_region
      %s100 = ssub.s32 %s8, 1
    $region12: #{_lambda_.19} parent=5 // pred_fallthru
      _
    %p101 = scmp.lt.s32.totalorder %s8, 2
    // Predicated region
    $region13: #{_lambda_.19} parent=5 // pred_check
      %p102 = pneg %p101
    $region14: #{_lambda_.19} parent=5 // pred_check_branch
      %104 = sbr.rel (%p102) target = $region16
    $region15: #{_lambda_.19} parent=5 // pred_region
      // Predicated region
      $region17: #{_lambda_.19} parent=15 // pred_check
        %p105 = pneg %p28
      $region18: #{_lambda_.19} parent=15 // pred_check_branch
        %107 = sbr.rel (%p105) target = $region20
      $region19: #{_lambda_.19} parent=15 // pred_region
        %p108 = scmp.lt.s32.totalorder %s8, 1
        %s109 = scalar_select %p108, %s8, 1
        %s110 = smul.addr %s109, 2
        %s111 = scalar_lea.vmem %s0, %s110
      $region20: #{_lambda_.19} parent=15 // pred_fallthru
        _
      // Predicated region
      $region21: #{_lambda_.19} parent=15 // pred_check
        %p112 = pneg %p54
      $region22: #{_lambda_.19} parent=15 // pred_check_branch
        %114 = sbr.rel (%p112) target = $region24
      $region23: #{_lambda_.19} parent=15 // pred_region
        %p115 = scmp.lt.s32.totalorder %s8, 1
        %s116 = scalar_select %p115, %s8, 1
        %s117 = smul.addr %s116, 8
        %s118 = smul.addr %s117, 8
        %s119 = scalar_lea.vmem %s1, %s118
      $region24: #{_lambda_.19} parent=15 // pred_fallthru
        _
    $region16: #{_lambda_.19} parent=5 // pred_fallthru
      _
    %p120 = scmp.le.s32.totalorder 1, %s8
    %p121 = scmp.lt.s32.totalorder %s8, 3
    %p122 = pnand %p120, %p121
    %p123 = pneg %p122
    // Predicated region
    $region25: #{_lambda_.19} parent=5 // pred_check
      _
    $region26: #{_lambda_.19} parent=5 // pred_check_branch
      %125 = sbr.rel (%p122) target = $region28
    $region27: #{_lambda_.19} parent=5 // pred_region
      %s126 = ssub.s32 %s8, 1
      %p127 = scmp.lt.s32.totalorder %s13, 1
      %s128 = scalar_select %p127, %s13, 1
      %s129 = smul.addr %s128, 2
      %s130 = scalar_lea.vmem %s0, %s129
      %p131 = pneg %p34
      %p132 = pneg %p31
      %p133 = scmp.lt.s32.totalorder %s13, 1
      %s134 = scalar_select %p133, %s13, 1
      %s135 = smul.addr %s134, 8
      %s136 = smul.addr %s135, 8
      %s137 = scalar_lea.vmem %s1, %s136
      %p138 = pneg %p60
      %p139 = pneg %p57
      %p140 = pneg %p86
      %p141 = pneg %p83
      %p142 = scmp.lt.s32.totalorder %s13, 1
      %s143 = scalar_select %p142, %s13, 1
      %s144 = smul.addr %s143, 2
      %s145 = scalar_lea.vmem %s2, %s144
      %p146 = scmp.lt.s32.totalorder %s13, 1
      %s147 = scalar_select %p146, %s13, 1
      %s148 = smul.addr %s147, 2
      %s149 = scalar_lea.vmem %s0, %s148
      %p150 = scmp.lt.s32.totalorder %s13, 1
      %s151 = scalar_select %p150, %s13, 1
      %s152 = smul.addr %s151, 8
      %s153 = smul.addr %s152, 8
      %s154 = scalar_lea.vmem %s1, %s153
      %p155 = scmp.lt.s32.totalorder %s13, 1
      %s156 = scalar_select %p155, %s13, 1
      %s157 = smul.addr %s156, 2
      %s158 = scalar_lea.vmem %s2, %s157
      %v159 = vld [vmem:[%s149] sm:$0x3]
      %v160 = vld [vmem:[%s154] sm:$0xff]
      %v161 = vld [vmem:[%s154 + $0x8] sm:$0xff]
      %v162 = vld [vmem:[%s154 + $0x10] sm:$0xff]
      %v163 = vld [vmem:[%s154 + $0x18] sm:$0xff]
      %v164 = vld [vmem:[%s154 + $0x20] sm:$0xff]
      %v165 = vld [vmem:[%s154 + $0x28] sm:$0xff]
      %v166 = vld [vmem:[%s154 + $0x30] sm:$0xff]
      %v167 = vld [vmem:[%s154 + $0x38] sm:$0xff]
      %vm168 = vcmask 523264
      %v170 = vsel %vm168, %v159, 0
      %172 = vmatprep.subr.mxu0 0.0
      %173 = vmatpush1.msra.mxu0 %v160
      %174 = vmatprep.subr.mxu0 0.0
      %175 = vmatpush1.msra.mxu0 %v161
      %176 = vmatprep.subr.mxu0 0.0
      %177 = vmatpush1.msra.mxu0 %v162
      %178 = vmatprep.subr.mxu0 0.0
      %179 = vmatpush1.msra.mxu0 %v163
      %180 = vmatprep.subr.mxu0 0.0
      %181 = vmatpush1.msra.mxu0 %v164
      %182 = vmatprep.subr.mxu0 0.0
      %183 = vmatpush1.msra.mxu0 %v165
      %184 = vmatprep.subr.mxu0 0.0
      %185 = vmatpush1.msra.mxu0 %v166
      %186 = vmatprep.subr.mxu0 0.0
      %187 = vmatpush1.msra.mxu0 %v167
      %188 = vmatprep.subr.mxu0 0.0
      %189 = vmatpush1.msra.mxu0 0.0
      %190 = vmatprep.subr.mxu0 0.0
      %191 = vmatpush1.msra.mxu0 0.0
      %192 = vmatprep.subr.mxu0 0.0
      %193 = vmatpush1.msra.mxu0 0.0
      %194 = vmatprep.subr.mxu0 0.0
      %195 = vmatpush1.msra.mxu0 0.0
      %196 = vmatprep.subr.mxu0 0.0
      %197 = vmatpush1.msra.mxu0 0.0
      %198 = vmatprep.subr.mxu0 0.0
      %199 = vmatpush1.msra.mxu0 0.0
      %200 = vmatprep.subr.mxu0 0.0
      %201 = vmatpush1.msra.mxu0 0.0
      %202 = vmatprep.subr.mxu0 0.0
      %203 = vmatpush1.msra.mxu0 0.0
      %204 = vmatprep.subr.mxu0 0.0
      %205 = vmatpush1.msra.mxu0 0.0
      %206 = vmatprep.subr.mxu0 0.0
      %207 = vmatpush1.msra.mxu0 0.0
      %208 = vmatprep.subr.mxu0 0.0
      %209 = vmatpush1.msra.mxu0 0.0
      %210 = vmatprep.subr.mxu0 0.0
      %211 = vmatpush1.msra.mxu0 0.0
      %212 = vmatprep.subr.mxu0 0.0
      %213 = vmatpush1.msra.mxu0 0.0
      %214 = vmatprep.subr.mxu0 0.0
      %215 = vmatpush1.msra.mxu0 0.0
      %216 = vmatprep.subr.mxu0 0.0
      %217 = vmatpush1.msra.mxu0 0.0
      %218 = vmatprep.subr.mxu0 0.0
      %219 = vmatpush1.msra.mxu0 0.0
      %220 = vmatprep.subr.mxu0 0.0
      %221 = vmatpush1.msra.mxu0 0.0
      %222 = vmatprep.subr.mxu0 0.0
      %223 = vmatpush1.msra.mxu0 0.0
      %224 = vmatprep.subr.mxu0 0.0
      %225 = vmatpush1.msra.mxu0 0.0
      %226 = vmatprep.subr.mxu0 0.0
      %227 = vmatpush1.msra.mxu0 0.0
      %228 = vmatprep.subr.mxu0 0.0
      %229 = vmatpush1.msra.mxu0 0.0
      %230 = vmatprep.subr.mxu0 0.0
      %231 = vmatpush1.msra.mxu0 0.0
      %232 = vmatprep.subr.mxu0 0.0
      %233 = vmatpush1.msra.mxu0 0.0
      %234 = vmatprep.subr.mxu0 0.0
      %235 = vmatpush1.msra.mxu0 0.0
      %236 = vmatprep.mubr.f32.mxu0 0.0
      %237 = vmatmul.mubr.f32.gmra.mrb[0].mxu0 %v170
      %v238 = vpop.f32.mrb[0].mxu0
      %v239 = vadd.f32 0.0, %v238
      %v240 = vpop.f32.mrb[0].mxu0
      %241 = vdwg.mxu0
      %vm242 = vcmask 517120
      %243 = vst.msk [vmem:[%s158] sm:$0x3] %vm242, %v239
      %p244 = scmp.lt.s32.totalorder %s13, 1
      %s245 = scalar_select %p244, %s13, 1
      %s246 = smul.addr %s245, 2
      %s247 = scalar_lea.vmem %s2, %s246
      // Predicated region
      $region29: #{_lambda_.19} parent=27 // pred_check
        %p248 = pneg %p83
      $region30: #{_lambda_.19} parent=27 // pred_check_branch
        %250 = sbr.rel (%p248) target = $region32
      $region31: #{_lambda_.19} parent=27 // pred_region
        _
      $region32: #{_lambda_.19} parent=27 // pred_fallthru
        _
    $region28: #{_lambda_.19} parent=5 // pred_fallthru
      _
    %p251 = scmp.le.s32.totalorder 2, %s8
    // Predicated region
    $region33: #{_lambda_.19} parent=5 // pred_check
      %p252 = pneg %p251
    $region34: #{_lambda_.19} parent=5 // pred_check_branch
      %254 = sbr.rel (%p252) target = $region36
    $region35: #{_lambda_.19} parent=5 // pred_region
      %s255 = ssub.s32 %s8, 2
      // Predicated region
      $region37: #{_lambda_.19} parent=35 // pred_check
        %p256 = pneg %p89
      $region38: #{_lambda_.19} parent=35 // pred_check_branch
        %258 = sbr.rel (%p256) target = $region40
      $region39: #{_lambda_.19} parent=35 // pred_region
        %p259 = scmp.lt.s32.totalorder %s14, 1
        %s260 = scalar_select %p259, %s14, 1
        %s261 = smul.addr %s260, 2
        %s262 = scalar_lea.vmem %s2, %s261
      $region40: #{_lambda_.19} parent=35 // pred_fallthru
        _
    $region36: #{_lambda_.19} parent=5 // pred_fallthru
      _
  $region6: #{_lambda_.19} parent=0 // loop_footer
    %s12 = sadd.s32 1, %s8
  $region7: #{_lambda_.19} parent=0 // loop_footer_branch
    %7 = sbr.rel target = $region3
  $region8: #{_lambda_.19} parent=0 // loop_exit
    _

// kernel: _lambda_.17
$region0: #{_lambda_.17}
  #allocation0 [shape = 'u32[]', space=smem, size = 0x4, offset = 0x4, fixed_abs, tag = 'smem constant byte address 0x4 - core index']
  #allocation1 [shape = 'u32[144,128]{1,0:T(1,128)}', space=vmem, size = 0x12000, scoped, tag = 'internal scratch']
  %s0 = inlined_call_operand.vmem [shape: f32[1,2,64], index: 0, kind: input, shape index: {}]
  %s1 = inlined_call_operand.vmem [shape: f32[1,64,64], index: 1, kind: input, shape index: {}]
  %s2 = inlined_call_operand.vmem [shape: f32[1,2,64], index: 2, kind: output, shape index: {}]
  %s3 = sld [smem:[#allocation0]]
  $region18: #{_lambda_.17} parent=0
    _
  %s5 = ssub.s32 1, %s3
  %s6 = scalar_select 0, %s5, %s3
  // Predicated region
  $region2: #{_lambda_.17} parent=0 // pred_check
    _
  $region3: #{_lambda_.17} parent=0 // pred_check_branch
    %8 = sbr.rel (0) target = $region5
  $region4: #{_lambda_.17} parent=0 // pred_region
    _
  $region5: #{_lambda_.17} parent=0 // pred_fallthru
    _
  // Predicated region
  $region6: #{_lambda_.17} parent=0 // pred_check
    _
  $region7: #{_lambda_.17} parent=0 // pred_check_branch
    %10 = sbr.rel (0) target = $region9
  $region8: #{_lambda_.17} parent=0 // pred_region
    _
  $region9: #{_lambda_.17} parent=0 // pred_fallthru
    _
  %v11 = vld [vmem:[%s0] sm:$0x3]
  %v12 = vld [vmem:[%s1] sm:$0xff]
  %v13 = vld [vmem:[%s1 + $0x8] sm:$0xff]
  %v14 = vld [vmem:[%s1 + $0x10] sm:$0xff]
  %v15 = vld [vmem:[%s1 + $0x18] sm:$0xff]
  %v16 = vld [vmem:[%s1 + $0x20] sm:$0xff]
  %v17 = vld [vmem:[%s1 + $0x28] sm:$0xff]
  %v18 = vld [vmem:[%s1 + $0x30] sm:$0xff]
  %v19 = vld [vmem:[%s1 + $0x38] sm:$0xff]
  %vm20 = vcmask 523264
  %v22 = vsel %vm20, %v11, 0
  %24 = vmatprep.subr.mxu0 0.0
  %25 = vmatpush1.msra.mxu0 %v12
  %26 = vmatprep.subr.mxu0 0.0
  %27 = vmatpush1.msra.mxu0 %v13
  %28 = vmatprep.subr.mxu0 0.0
  %29 = vmatpush1.msra.mxu0 %v14
  %30 = vmatprep.subr.mxu0 0.0
  %31 = vmatpush1.msra.mxu0 %v15
  %32 = vmatprep.subr.mxu0 0.0
  %33 = vmatpush1.msra.mxu0 %v16
  %34 = vmatprep.subr.mxu0 0.0
  %35 = vmatpush1.msra.mxu0 %v17
  %36 = vmatprep.subr.mxu0 0.0
  %37 = vmatpush1.msra.mxu0 %v18
  %38 = vmatprep.subr.mxu0 0.0
  %39 = vmatpush1.msra.mxu0 %v19
  %40 = vmatprep.subr.mxu0 0.0
  %41 = vmatpush1.msra.mxu0 0.0
  %42 = vmatprep.subr.mxu0 0.0
  %43 = vmatpush1.msra.mxu0 0.0
  %44 = vmatprep.subr.mxu0 0.0
  %45 = vmatpush1.msra.mxu0 0.0
  %46 = vmatprep.subr.mxu0 0.0
  %47 = vmatpush1.msra.mxu0 0.0
  %48 = vmatprep.subr.mxu0 0.0
  %49 = vmatpush1.msra.mxu0 0.0
  %50 = vmatprep.subr.mxu0 0.0
  %51 = vmatpush1.msra.mxu0 0.0
  %52 = vmatprep.subr.mxu0 0.0
  %53 = vmatpush1.msra.mxu0 0.0
  %54 = vmatprep.subr.mxu0 0.0
  %55 = vmatpush1.msra.mxu0 0.0
  %56 = vmatprep.subr.mxu0 0.0
  %57 = vmatpush1.msra.mxu0 0.0
  %58 = vmatprep.subr.mxu0 0.0
  %59 = vmatpush1.msra.mxu0 0.0
  %60 = vmatprep.subr.mxu0 0.0
  %61 = vmatpush1.msra.mxu0 0.0
  %62 = vmatprep.subr.mxu0 0.0
  %63 = vmatpush1.msra.mxu0 0.0
  %64 = vmatprep.subr.mxu0 0.0
  %65 = vmatpush1.msra.mxu0 0.0
  %66 = vmatprep.subr.mxu0 0.0
  %67 = vmatpush1.msra.mxu0 0.0
  %68 = vmatprep.subr.mxu0 0.0
  %69 = vmatpush1.msra.mxu0 0.0
  %70 = vmatprep.subr.mxu0 0.0
  %71 = vmatpush1.msra.mxu0 0.0
  %72 = vmatprep.subr.mxu0 0.0
  %73 = vmatpush1.msra.mxu0 0.0
  %74 = vmatprep.subr.mxu0 0.0
  %75 = vmatpush1.msra.mxu0 0.0
  %76 = vmatprep.subr.mxu0 0.0
  %77 = vmatpush1.msra.mxu0 0.0
  %78 = vmatprep.subr.mxu0 0.0
  %79 = vmatpush1.msra.mxu0 0.0
  %80 = vmatprep.subr.mxu0 0.0
  %81 = vmatpush1.msra.mxu0 0.0
  %82 = vmatprep.subr.mxu0 0.0
  %83 = vmatpush1.msra.mxu0 0.0
  %84 = vmatprep.subr.mxu0 0.0
  %85 = vmatpush1.msra.mxu0 0.0
  %86 = vmatprep.subr.mxu0 0.0
  %87 = vmatpush1.msra.mxu0 0.0
  %88 = vmatprep.mubr.f32.mxu0 0.0
  %89 = vmatmul.mubr.f32.gmra.mrb[0].mxu0 %v22
  %v90 = vpop.f32.mrb[0].mxu0
  %v91 = vadd.f32 0.0, %v90
  %v92 = vpop.f32.mrb[0].mxu0
  %93 = vdwg.mxu0
  %vm94 = vcmask 517120
  %95 = vst.msk [vmem:[%s2] sm:$0x3] %vm94, %v91
  // Predicated region
  $region10: #{_lambda_.17} parent=0 // pred_check
    _
  $region11: #{_lambda_.17} parent=0 // pred_check_branch
    %97 = sbr.rel (0) target = $region13
  $region12: #{_lambda_.17} parent=0 // pred_region
    _
  $region13: #{_lambda_.17} parent=0 // pred_fallthru
    _
  // Predicated region
  $region14: #{_lambda_.17} parent=0 // pred_check
    _
  $region15: #{_lambda_.17} parent=0 // pred_check_branch
    %99 = sbr.rel (0) target = $region17
  $region16: #{_lambda_.17} parent=0 // pred_region
    _
  $region17: #{_lambda_.17} parent=0 // pred_fallthru
    _

// kernel: _lambda_.15
$region0: #{_lambda_.15}
  #allocation0 [shape = 'u32[]', space=smem, size = 0x4, offset = 0x4, fixed_abs, tag = 'smem constant byte address 0x4 - core index']
  #allocation1 [shape = 'u32[144,128]{1,0:T(1,128)}', space=vmem, size = 0x12000, scoped, tag = 'internal scratch']
  %s0 = inlined_call_operand.vmem [shape: f32[8,8], index: 0, kind: input, shape index: {}]
  %s1 = inlined_call_operand.vmem [shape: f32[8,8], index: 1, kind: input, shape index: {}]
  %s2 = inlined_call_operand.vmem [shape: f32[1,8], index: 2, kind: input, shape index: {}]
  %s3 = inlined_call_operand.vmem [shape: f32[8,8], index: 3, kind: output, shape index: {}]
  %s4 = sld [smem:[#allocation0]]
  $region22: #{_lambda_.15} parent=0
    _
  %s6 = ssub.s32 1, %s4
  %s7 = scalar_select 0, %s6, %s4
  // Predicated region
  $region2: #{_lambda_.15} parent=0 // pred_check
    _
  $region3: #{_lambda_.15} parent=0 // pred_check_branch
    %9 = sbr.rel (0) target = $region5
  $region4: #{_lambda_.15} parent=0 // pred_region
    _
  $region5: #{_lambda_.15} parent=0 // pred_fallthru
    _
  // Predicated region
  $region6: #{_lambda_.15} parent=0 // pred_check
    _
  $region7: #{_lambda_.15} parent=0 // pred_check_branch
    %11 = sbr.rel (0) target = $region9
  $region8: #{_lambda_.15} parent=0 // pred_region
    _
  $region9: #{_lambda_.15} parent=0 // pred_fallthru
    _
  // Predicated region
  $region10: #{_lambda_.15} parent=0 // pred_check
    _
  $region11: #{_lambda_.15} parent=0 // pred_check_branch
    %13 = sbr.rel (0) target = $region13
  $region12: #{_lambda_.15} parent=0 // pred_region
    _
  $region13: #{_lambda_.15} parent=0 // pred_fallthru
    _
  %v14 = vld [vmem:[%s0] sm:$0xff]
  %v15 = vld [vmem:[%s1] sm:$0xff]
  %v16 = vld [vmem:[%s2] sm:$0x1]
  %v18 = vlaneseq
  %v19 = vshrl.u32 %v18, 7
  %v20 = vsub.s32 0, %v19
  %v21 = vrot.slane %v16, %v20
  %vm23 = vcmask 64512
  %v25 = vsel %vm23, %v14, 0
  %27 = vmatprep.subr.mxu0 0.0
  %28 = vmatpush1.msra.mxu0 %v15
  %29 = vmatprep.subr.mxu0 0.0
  %30 = vmatpush1.msra.mxu0 0.0
  %31 = vmatprep.subr.mxu0 0.0
  %32 = vmatpush1.msra.mxu0 0.0
  %33 = vmatprep.subr.mxu0 0.0
  %34 = vmatpush1.msra.mxu0 0.0
  %35 = vmatprep.subr.mxu0 0.0
  %36 = vmatpush1.msra.mxu0 0.0
  %37 = vmatprep.subr.mxu0 0.0
  %38 = vmatpush1.msra.mxu0 0.0
  %39 = vmatprep.subr.mxu0 0.0
  %40 = vmatpush1.msra.mxu0 0.0
  %41 = vmatprep.subr.mxu0 0.0
  %42 = vmatpush1.msra.mxu0 0.0
  %43 = vmatprep.subr.mxu0 0.0
  %44 = vmatpush1.msra.mxu0 0.0
  %45 = vmatprep.subr.mxu0 0.0
  %46 = vmatpush1.msra.mxu0 0.0
  %47 = vmatprep.subr.mxu0 0.0
  %48 = vmatpush1.msra.mxu0 0.0
  %49 = vmatprep.subr.mxu0 0.0
  %50 = vmatpush1.msra.mxu0 0.0
  %51 = vmatprep.subr.mxu0 0.0
  %52 = vmatpush1.msra.mxu0 0.0
  %53 = vmatprep.subr.mxu0 0.0
  %54 = vmatpush1.msra.mxu0 0.0
  %55 = vmatprep.subr.mxu0 0.0
  %56 = vmatpush1.msra.mxu0 0.0
  %57 = vmatprep.subr.mxu0 0.0
  %58 = vmatpush1.msra.mxu0 0.0
  %59 = vmatprep.subr.mxu0 0.0
  %60 = vmatpush1.msra.mxu0 0.0
  %61 = vmatprep.subr.mxu0 0.0
  %62 = vmatpush1.msra.mxu0 0.0
  %63 = vmatprep.subr.mxu0 0.0
  %64 = vmatpush1.msra.mxu0 0.0
  %65 = vmatprep.subr.mxu0 0.0
  %66 = vmatpush1.msra.mxu0 0.0
  %67 = vmatprep.subr.mxu0 0.0
  %68 = vmatpush1.msra.mxu0 0.0
  %69 = vmatprep.subr.mxu0 0.0
  %70 = vmatpush1.msra.mxu0 0.0
  %71 = vmatprep.subr.mxu0 0.0
  %72 = vmatpush1.msra.mxu0 0.0
  %73 = vmatprep.subr.mxu0 0.0
  %74 = vmatpush1.msra.mxu0 0.0
  %75 = vmatprep.subr.mxu0 0.0
  %76 = vmatpush1.msra.mxu0 0.0
  %77 = vmatprep.subr.mxu0 0.0
  %78 = vmatpush1.msra.mxu0 0.0
  %79 = vmatprep.subr.mxu0 0.0
  %80 = vmatpush1.msra.mxu0 0.0
  %81 = vmatprep.subr.mxu0 0.0
  %82 = vmatpush1.msra.mxu0 0.0
  %83 = vmatprep.subr.mxu0 0.0
  %84 = vmatpush1.msra.mxu0 0.0
  %85 = vmatprep.subr.mxu0 0.0
  %86 = vmatpush1.msra.mxu0 0.0
  %87 = vmatprep.subr.mxu0 0.0
  %88 = vmatpush1.msra.mxu0 0.0
  %89 = vmatprep.subr.mxu0 0.0
  %90 = vmatpush1.msra.mxu0 0.0
  %91 = vmatprep.mubr.f32.mxu0 0.0
  %92 = vmatmul.mubr.f32.gmra.mrb[0].mxu0 %v25
  %v93 = vpop.f32.mrb[0].mxu0
  %v94 = vadd.f32 %v21, %v93
  %v95 = vpop.f32.mrb[0].mxu0
  %96 = vdwg.mxu0
  %97 = vst.msk [vmem:[%s3] sm:$0xff] %vm23, %v94
  // Predicated region
  $region14: #{_lambda_.15} parent=0 // pred_check
    _
  $region15: #{_lambda_.15} parent=0 // pred_check_branch
    %99 = sbr.rel (0) target = $region17
  $region16: #{_lambda_.15} parent=0 // pred_region
    _
  $region17: #{_lambda_.15} parent=0 // pred_fallthru
    _
  // Predicated region
  $region18: #{_lambda_.15} parent=0 // pred_check
    _
  $region19: #{_lambda_.15} parent=0 // pred_check_branch
    %101 = sbr.rel (0) target = $region21
  $region20: #{_lambda_.15} parent=0 // pred_region
    _
  $region21: #{_lambda_.15} parent=0 // pred_fallthru
    _

// kernel: _lambda_.16
$region0: #{_lambda_.16}
  #allocation0 [shape = 'u32[]', space=smem, size = 0x4, offset = 0x4, fixed_abs, tag = 'smem constant byte address 0x4 - core index']
  #allocation1 [shape = 'u32[144,128]{1,0:T(1,128)}', space=vmem, size = 0x12000, scoped, tag = 'internal scratch']
  %s0 = inlined_call_operand.vmem [shape: f32[8,4], index: 0, kind: input, shape index: {}]
  %s1 = inlined_call_operand.vmem [shape: f32[4,4], index: 1, kind: input, shape index: {}]
  %s2 = inlined_call_operand.vmem [shape: f32[1,4], index: 2, kind: input, shape index: {}]
  %s3 = inlined_call_operand.vmem [shape: f32[8,4], index: 3, kind: output, shape index: {}]
  %s4 = sld [smem:[#allocation0]]
  $region22: #{_lambda_.16} parent=0
    _
  %s6 = ssub.s32 1, %s4
  %s7 = scalar_select 0, %s6, %s4
  // Predicated region
  $region2: #{_lambda_.16} parent=0 // pred_check
    _
  $region3: #{_lambda_.16} parent=0 // pred_check_branch
    %9 = sbr.rel (0) target = $region5
  $region4: #{_lambda_.16} parent=0 // pred_region
    _
  $region5: #{_lambda_.16} parent=0 // pred_fallthru
    _
  // Predicated region
  $region6: #{_lambda_.16} parent=0 // pred_check
    _
  $region7: #{_lambda_.16} parent=0 // pred_check_branch
    %11 = sbr.rel (0) target = $region9
  $region8: #{_lambda_.16} parent=0 // pred_region
    _
  $region9: #{_lambda_.16} parent=0 // pred_fallthru
    _
  // Predicated region
  $region10: #{_lambda_.16} parent=0 // pred_check
    _
  $region11: #{_lambda_.16} parent=0 // pred_check_branch
    %13 = sbr.rel (0) target = $region13
  $region12: #{_lambda_.16} parent=0 // pred_region
    _
  $region13: #{_lambda_.16} parent=0 // pred_fallthru
    _
  %v14 = vld [vmem:[%s0] sm:$0xff]
  %v15 = vld [vmem:[%s1] sm:$0xf]
  %v16 = vld [vmem:[%s2] sm:$0x1]
  %v18 = vlaneseq
  %v19 = vshrl.u32 %v18, 7
  %v20 = vsub.s32 0, %v19
  %v21 = vrot.slane %v16, %v20
  %vm23 = vcmask 31744
  %v25 = vsel %vm23, %v14, 0
  %vm27 = vcmask 1043456
  %v29 = vsel %vm27, %v15, 0
  %31 = vmatprep.subr.mxu0 0.0
  %32 = vmatpush1.msra.mxu0 %v29
  %33 = vmatprep.subr.mxu0 0.0
  %34 = vmatpush1.msra.mxu0 0.0
  %35 = vmatprep.subr.mxu0 0.0
  %36 = vmatpush1.msra.mxu0 0.0
  %37 = vmatprep.subr.mxu0 0.0
  %38 = vmatpush1.msra.mxu0 0.0
  %39 = vmatprep.subr.mxu0 0.0
  %40 = vmatpush1.msra.mxu0 0.0
  %41 = vmatprep.subr.mxu0 0.0
  %42 = vmatpush1.msra.mxu0 0.0
  %43 = vmatprep.subr.mxu0 0.0
  %44 = vmatpush1.msra.mxu0 0.0
  %45 = vmatprep.subr.mxu0 0.0
  %46 = vmatpush1.msra.mxu0 0.0
  %47 = vmatprep.subr.mxu0 0.0
  %48 = vmatpush1.msra.mxu0 0.0
  %49 = vmatprep.subr.mxu0 0.0
  %50 = vmatpush1.msra.mxu0 0.0
  %51 = vmatprep.subr.mxu0 0.0
  %52 = vmatpush1.msra.mxu0 0.0
  %53 = vmatprep.subr.mxu0 0.0
  %54 = vmatpush1.msra.mxu0 0.0
  %55 = vmatprep.subr.mxu0 0.0
  %56 = vmatpush1.msra.mxu0 0.0
  %57 = vmatprep.subr.mxu0 0.0
  %58 = vmatpush1.msra.mxu0 0.0
  %59 = vmatprep.subr.mxu0 0.0
  %60 = vmatpush1.msra.mxu0 0.0
  %61 = vmatprep.subr.mxu0 0.0
  %62 = vmatpush1.msra.mxu0 0.0
  %63 = vmatprep.subr.mxu0 0.0
  %64 = vmatpush1.msra.mxu0 0.0
  %65 = vmatprep.subr.mxu0 0.0
  %66 = vmatpush1.msra.mxu0 0.0
  %67 = vmatprep.subr.mxu0 0.0
  %68 = vmatpush1.msra.mxu0 0.0
  %69 = vmatprep.subr.mxu0 0.0
  %70 = vmatpush1.msra.mxu0 0.0
  %71 = vmatprep.subr.mxu0 0.0
  %72 = vmatpush1.msra.mxu0 0.0
  %73 = vmatprep.subr.mxu0 0.0
  %74 = vmatpush1.msra.mxu0 0.0
  %75 = vmatprep.subr.mxu0 0.0
  %76 = vmatpush1.msra.mxu0 0.0
  %77 = vmatprep.subr.mxu0 0.0
  %78 = vmatpush1.msra.mxu0 0.0
  %79 = vmatprep.subr.mxu0 0.0
  %80 = vmatpush1.msra.mxu0 0.0
  %81 = vmatprep.subr.mxu0 0.0
  %82 = vmatpush1.msra.mxu0 0.0
  %83 = vmatprep.subr.mxu0 0.0
  %84 = vmatpush1.msra.mxu0 0.0
  %85 = vmatprep.subr.mxu0 0.0
  %86 = vmatpush1.msra.mxu0 0.0
  %87 = vmatprep.subr.mxu0 0.0
  %88 = vmatpush1.msra.mxu0 0.0
  %89 = vmatprep.subr.mxu0 0.0
  %90 = vmatpush1.msra.mxu0 0.0
  %91 = vmatprep.subr.mxu0 0.0
  %92 = vmatpush1.msra.mxu0 0.0
  %93 = vmatprep.subr.mxu0 0.0
  %94 = vmatpush1.msra.mxu0 0.0
  %95 = vmatprep.mubr.f32.mxu0 0.0
  %96 = vmatmul.mubr.f32.gmra.mrb[0].mxu0 %v25
  %v97 = vpop.f32.mrb[0].mxu0
  %v98 = vadd.f32 %v21, %v97
  %v99 = vpop.f32.mrb[0].mxu0
  %100 = vdwg.mxu0
  %101 = vst.msk [vmem:[%s3] sm:$0xff] %vm23, %v98
  // Predicated region
  $region14: #{_lambda_.16} parent=0 // pred_check
    _
  $region15: #{_lambda_.16} parent=0 // pred_check_branch
    %103 = sbr.rel (0) target = $region17
  $region16: #{_lambda_.16} parent=0 // pred_region
    _
  $region17: #{_lambda_.16} parent=0 // pred_fallthru
    _
  // Predicated region
  $region18: #{_lambda_.16} parent=0 // pred_check
    _
  $region19: #{_lambda_.16} parent=0 // pred_check_branch
    %105 = sbr.rel (0) target = $region21
  $region20: #{_lambda_.16} parent=0 // pred_region
    _
  $region21: #{_lambda_.16} parent=0 // pred_fallthru
    _

// kernel: _lambda_.23
$region0: #{_lambda_.23}
  #allocation0 [shape = 'u32[]', space=smem, size = 0x4, offset = 0x4, fixed_abs, tag = 'smem constant byte address 0x4 - core index']
  #allocation1 [shape = 'u32[144,128]{1,0:T(1,128)}', space=vmem, size = 0x12000, scoped, tag = 'internal scratch']
  %s0 = inlined_call_operand.vmem [shape: f32[16,16], index: 0, kind: input, shape index: {}]
  %s1 = inlined_call_operand.vmem [shape: f32[16,8], index: 1, kind: input, shape index: {}]
  %s2 = inlined_call_operand.vmem [shape: f32[1,8], index: 2, kind: input, shape index: {}]
  %s3 = inlined_call_operand.vmem [shape: f32[16,8], index: 3, kind: output, shape index: {}]
  %s4 = sld [smem:[#allocation0]]
  $region22: #{_lambda_.23} parent=0
    _
  %s6 = ssub.s32 1, %s4
  %s7 = scalar_select 0, %s6, %s4
  // Predicated region
  $region2: #{_lambda_.23} parent=0 // pred_check
    _
  $region3: #{_lambda_.23} parent=0 // pred_check_branch
    %9 = sbr.rel (0) target = $region5
  $region4: #{_lambda_.23} parent=0 // pred_region
    _
  $region5: #{_lambda_.23} parent=0 // pred_fallthru
    _
  // Predicated region
  $region6: #{_lambda_.23} parent=0 // pred_check
    _
  $region7: #{_lambda_.23} parent=0 // pred_check_branch
    %11 = sbr.rel (0) target = $region9
  $region8: #{_lambda_.23} parent=0 // pred_region
    _
  $region9: #{_lambda_.23} parent=0 // pred_fallthru
    _
  // Predicated region
  $region10: #{_lambda_.23} parent=0 // pred_check
    _
  $region11: #{_lambda_.23} parent=0 // pred_check_branch
    %13 = sbr.rel (0) target = $region13
  $region12: #{_lambda_.23} parent=0 // pred_region
    _
  $region13: #{_lambda_.23} parent=0 // pred_fallthru
    _
  %v14 = vld [vmem:[%s0] sm:$0xff]
  %v15 = vld [vmem:[%s0 + $0x8] sm:$0xff]
  %v16 = vld [vmem:[%s1] sm:$0xff]
  %v17 = vld [vmem:[%s1 + $0x8] sm:$0xff]
  %v18 = vld [vmem:[%s2] sm:$0x1]
  %v20 = vlaneseq
  %v21 = vshrl.u32 %v20, 7
  %v22 = vsub.s32 0, %v21
  %v23 = vrot.slane %v18, %v22
  %vm25 = vcmask 130048
  %v27 = vsel %vm25, %v14, 0
  %v30 = vsel %vm25, %v15, 0
  %32 = vmatprep.subr.mxu0 0.0
  %33 = vmatpush1.msra.mxu0 %v16
  %34 = vmatprep.subr.mxu0 0.0
  %35 = vmatpush1.msra.mxu0 %v17
  %36 = vmatprep.subr.mxu0 0.0
  %37 = vmatpush1.msra.mxu0 0.0
  %38 = vmatprep.subr.mxu0 0.0
  %39 = vmatpush1.msra.mxu0 0.0
  %40 = vmatprep.subr.mxu0 0.0
  %41 = vmatpush1.msra.mxu0 0.0
  %42 = vmatprep.subr.mxu0 0.0
  %43 = vmatpush1.msra.mxu0 0.0
  %44 = vmatprep.subr.mxu0 0.0
  %45 = vmatpush1.msra.mxu0 0.0
  %46 = vmatprep.subr.mxu0 0.0
  %47 = vmatpush1.msra.mxu0 0.0
  %48 = vmatprep.subr.mxu0 0.0
  %49 = vmatpush1.msra.mxu0 0.0
  %50 = vmatprep.subr.mxu0 0.0
  %51 = vmatpush1.msra.mxu0 0.0
  %52 = vmatprep.subr.mxu0 0.0
  %53 = vmatpush1.msra.mxu0 0.0
  %54 = vmatprep.subr.mxu0 0.0
  %55 = vmatpush1.msra.mxu0 0.0
  %56 = vmatprep.subr.mxu0 0.0
  %57 = vmatpush1.msra.mxu0 0.0
  %58 = vmatprep.subr.mxu0 0.0
  %59 = vmatpush1.msra.mxu0 0.0
  %60 = vmatprep.subr.mxu0 0.0
  %61 = vmatpush1.msra.mxu0 0.0
  %62 = vmatprep.subr.mxu0 0.0
  %63 = vmatpush1.msra.mxu0 0.0
  %64 = vmatprep.subr.mxu0 0.0
  %65 = vmatpush1.msra.mxu0 0.0
  %66 = vmatprep.subr.mxu0 0.0
  %67 = vmatpush1.msra.mxu0 0.0
  %68 = vmatprep.subr.mxu0 0.0
  %69 = vmatpush1.msra.mxu0 0.0
  %70 = vmatprep.subr.mxu0 0.0
  %71 = vmatpush1.msra.mxu0 0.0
  %72 = vmatprep.subr.mxu0 0.0
  %73 = vmatpush1.msra.mxu0 0.0
  %74 = vmatprep.subr.mxu0 0.0
  %75 = vmatpush1.msra.mxu0 0.0
  %76 = vmatprep.subr.mxu0 0.0
  %77 = vmatpush1.msra.mxu0 0.0
  %78 = vmatprep.subr.mxu0 0.0
  %79 = vmatpush1.msra.mxu0 0.0
  %80 = vmatprep.subr.mxu0 0.0
  %81 = vmatpush1.msra.mxu0 0.0
  %82 = vmatprep.subr.mxu0 0.0
  %83 = vmatpush1.msra.mxu0 0.0
  %84 = vmatprep.subr.mxu0 0.0
  %85 = vmatpush1.msra.mxu0 0.0
  %86 = vmatprep.subr.mxu0 0.0
  %87 = vmatpush1.msra.mxu0 0.0
  %88 = vmatprep.subr.mxu0 0.0
  %89 = vmatpush1.msra.mxu0 0.0
  %90 = vmatprep.subr.mxu0 0.0
  %91 = vmatpush1.msra.mxu0 0.0
  %92 = vmatprep.subr.mxu0 0.0
  %93 = vmatpush1.msra.mxu0 0.0
  %94 = vmatprep.subr.mxu0 0.0
  %95 = vmatpush1.msra.mxu0 0.0
  %96 = vmatprep.mubr.f32.mxu0 0.0
  %97 = vmatmul.mubr.f32.gmra.mrb[0].mxu0 %v27
  %v98 = vpop.f32.mrb[0].mxu0
  %v99 = vadd.f32 %v23, %v98
  %v100 = vpop.f32.mrb[0].mxu0
  %101 = vmatprep.mubr.f32.mxu0 0.0
  %102 = vmatmul.mubr.f32.gmra.mrb[0].mxu0 %v30
  %v103 = vpop.f32.mrb[0].mxu0
  %v104 = vadd.f32 %v23, %v103
  %v105 = vpop.f32.mrb[0].mxu0
  %106 = vdwg.mxu0
  %vm107 = vcmask 64512
  %108 = vst.msk [vmem:[%s3] sm:$0xff] %vm107, %v99
  %109 = vst.msk [vmem:[%s3 + $0x8] sm:$0xff] %vm107, %v104
  // Predicated region
  $region14: #{_lambda_.23} parent=0 // pred_check
    _
  $region15: #{_lambda_.23} parent=0 // pred_check_branch
    %111 = sbr.rel (0) target = $region17
  $region16: #{_lambda_.23} parent=0 // pred_region
    _
  $region17: #{_lambda_.23} parent=0 // pred_fallthru
    _
  // Predicated region
  $region18: #{_lambda_.23} parent=0 // pred_check
    _
  $region19: #{_lambda_.23} parent=0 // pred_check_branch
    %113 = sbr.rel (0) target = $region21
  $region20: #{_lambda_.23} parent=0 // pred_region
    _
  $region21: #{_lambda_.23} parent=0 // pred_fallthru
    _

</llo_original>
